<compile_context>
chip_gen: v5e
topology: v5e:2x2
jax: 0.10.0
libtpu: 0.0.40
codegen_flags: <defaults>
</compile_context>

<pallas_src>
import numpy as np
import jax
import jax.numpy as jnp
from jax import lax
from jax.experimental import pallas as pl
from jax.experimental.pallas import tpu as pltpu


# ----------------------------------------------------------------------------
# host-side glue: lower Conv3d(k=3, pad=1) on a fixed G^3 grid to dense matrices
# ----------------------------------------------------------------------------
def _round_up(x, m):
    return (x + m - 1) // m * m


def _cdiv(a, b):
    return (a + b - 1) // b


def _conv3d_taps(G):
    """All (vo, vi, kz, ky, kx) valid taps of a k=3, pad=1 conv on a G^3 grid."""
    taps = []
    for oz in range(G):
        for oy in range(G):
            for ox in range(G):
                vo = (oz * G + oy) * G + ox
                for kz in range(3):
                    iz = oz + kz - 1
                    if not 0 <= iz < G:
                        continue
                    for ky in range(3):
                        iy = oy + ky - 1
                        if not 0 <= iy < G:
                            continue
                        for kx in range(3):
                            ix = ox + kx - 1
                            if not 0 <= ix < G:
                                continue
                            vi = (iz * G + iy) * G + ix
                            taps.append((vo, vi, kz, ky, kx))
    return taps


def conv3d_to_matrix_vmajor_in(weight, G, Vp):
    """Dense operator; rows = vi*C_in + ci (tgt's natural (...,z,y,x,C) flatten),
    cols = co*Vp + vo (channel-major, voxel count padded V -> Vp, pad cols zero)."""
    w = np.asarray(weight, np.float32)
    C_out, C_in = w.shape[0], w.shape[1]
    mat = np.zeros((G ** 3 * C_in, C_out * Vp), np.float32)
    ci = np.arange(C_in)[:, None]
    co = np.arange(C_out)[None, :]
    for vo, vi, kz, ky, kx in _conv3d_taps(G):
        mat[vi * C_in + ci, co * Vp + vo] = w[:, :, kz, ky, kx].T
    return mat


def conv3d_to_matrix_cmajor_in(weight, G, Vp):
    """Dense operator; rows = ci*Vp + vi (matches previous layer's output layout),
    cols = co*Vp + vo. Rows/cols with v >= V stay zero."""
    w = np.asarray(weight, np.float32)
    C_out, C_in = w.shape[0], w.shape[1]
    mat = np.zeros((C_in * Vp, C_out * Vp), np.float32)
    ci = np.arange(C_in)[:, None]
    co = np.arange(C_out)[None, :]
    for vo, vi, kz, ky, kx in _conv3d_taps(G):
        mat[ci * Vp + vi, co * Vp + vo] = w[:, :, kz, ky, kx].T
    return mat


def _expand_bias(b, V, Vp):
    """bias (C_out,) -> (1, C_out*Vp) in channel-major layout, pad voxels zero."""
    b = np.asarray(b, np.float32).reshape(-1)
    be = np.zeros((b.shape[0], Vp), np.float32)
    be[:, :V] = b[:, None]
    return be.reshape(1, -1)


def _full_spec(arr):
    nd = arr.ndim
    return pl.BlockSpec(arr.shape, lambda i: (0,) * nd)


# ----------------------------------------------------------------------------
# the Pallas kernel: 3 conv-as-matmul layers + LeakyReLU + tanh + candidate reduce
# ----------------------------------------------------------------------------
def _cpg_kernel(src_ref, tgt_ref, cand_ref,
                w1s_ref, w1t_ref, b1_ref, w2_ref, b2_ref, w3_ref, b3_ref,
                o_ref):
    # cast matmul operands to bf16 in-kernel (saves a full prologue HBM pass)
    src = src_ref[...].astype(jnp.bfloat16)                           # (tm, 32)
    tgt = tgt_ref[...].astype(jnp.bfloat16)                           # (tm, V*32)

    # layer 1: conv(cost) = conv(src_const) - conv(tgt), both as MXU matmuls
    h = (jnp.dot(src, w1s_ref[...], preferred_element_type=jnp.float32)
         - jnp.dot(tgt, w1t_ref[...], preferred_element_type=jnp.float32)
         + b1_ref[...])
    h = jnp.maximum(h, 0.01 * h)                                      # LeakyReLU

    # layer 2: Conv3d(16->4) + LeakyReLU
    h = jnp.dot(h.astype(jnp.bfloat16), w2_ref[...],
                preferred_element_type=jnp.float32) + b2_ref[...]
    h = jnp.maximum(h, 0.01 * h)

    # layer 3: Conv3d(4->1)
    h = jnp.dot(h.astype(jnp.bfloat16), w3_ref[...],
                preferred_element_type=jnp.float32) + b3_ref[...]

    # "softmax" (actually Tanh in the module); pad lanes are tanh(0) = 0
    wts = jnp.tanh(h)                                                 # (tm, Vp) f32

    # refined[k, m] = sum_v wts[m, v] * candidates[k, m, v]  -> lane-dense (3, tm)
    V = cand_ref.shape[-1]
    cand = cand_ref[...].astype(jnp.float32)                          # (3, tm, V) f32
    o_ref[...] = jnp.sum(cand * wts[None, :, :V], axis=-1)


def _pick_tile(M, tm_req):
    """Sample tile: big enough to amortize per-step cost, multiple of 16, and
    at least two tiles for large M so both v7x TensorCores get work."""
    tm = max(16, min(tm_req, _round_up(M, 16)))
    n = _cdiv(M, tm)
    if n == 1 and M > 256:
        tm = _round_up(_cdiv(M, 2), 256)
        n = _cdiv(M, tm)
    return tm, n


def cpg_forward_pallas(src_feat, tgt_feat, candidates, params, r, s, tm=1024):
    B, N, C, _ = candidates.shape
    G = int(2 * r / s + 1)
    V = G ** 3
    assert C == V, "candidates' third dim must equal grid_size**3"
    C0 = src_feat.shape[-1]                     # 32
    C1 = params[0][0].shape[0]                  # 16
    C2 = params[1][0].shape[0]                  # 4
    assert params[2][0].shape[0] == 1

    Vp = _round_up(V, 32)                       # lane-friendly padded voxel count
    M = B * N
    tm, n_tiles = _pick_tile(M, tm)
    Mtot = n_tiles * tm                         # padded ONLY in the kernel output

    # ---- operand packing: reshapes are free; no jnp.pad copies anywhere ----
    src = src_feat.reshape(M, C0)                                     # (M, 32)    f32
    tgt = tgt_feat.reshape(M, V * C0)                                 # (M, V*32)  f32
    # single fused transpose+convert pass (bf16 halves the candidate stream)
    cand = jnp.transpose(candidates.reshape(M, V, 3),
                         (2, 0, 1)).astype(jnp.bfloat16)              # (3, M, V)  bf16

    # ---- dense conv operators + folded-src matrix + expanded biases ----
    (w1, b1), (w2, b2), (w3, b3) = params
    m1 = conv3d_to_matrix_vmajor_in(w1, G, Vp)                        # (V*C0, C1*Vp)
    m1s = m1.reshape(V, C0, C1 * Vp).sum(axis=0)                      # (C0,  C1*Vp)
    m2 = conv3d_to_matrix_cmajor_in(w2, G, Vp)                        # (C1*Vp, C2*Vp)
    m3 = conv3d_to_matrix_cmajor_in(w3, G, Vp)                        # (C2*Vp, Vp)

    w1t = jnp.asarray(m1, jnp.bfloat16)
    w1s = jnp.asarray(m1s, jnp.bfloat16)
    w2d = jnp.asarray(m2, jnp.bfloat16)
    w3d = jnp.asarray(m3, jnp.bfloat16)
    b1e = jnp.asarray(_expand_bias(b1, V, Vp))
    b2e = jnp.asarray(_expand_bias(b2, V, Vp))
    b3e = jnp.asarray(_expand_bias(b3, V, Vp))

    n1, n2, n3 = C1 * Vp, C2 * Vp, Vp
    flops = (2 * Mtot * (C0 * n1 + V * C0 * n1 + n1 * n2 + n2 * n3)
             + 2 * Mtot * (n1 + n2 + n3) + 6 * Mtot * V)
    bytes_accessed = (int(src.size) * 4 + int(tgt.size) * 4 + int(cand.size) * 2
                      + (int(w1s.size) + int(w1t.size) + int(w2d.size)
                         + int(w3d.size)) * 2
                      + (int(b1e.size) + int(b2e.size) + int(b3e.size)) * 4
                      + 3 * Mtot * 4)

    out = pl.pallas_call(
        _cpg_kernel,
        out_shape=jax.ShapeDtypeStruct((3, Mtot), jnp.float32),
        grid_spec=pltpu.PrefetchScalarGridSpec(
            num_scalar_prefetch=0,
            grid=(n_tiles,),
            in_specs=[
                pl.BlockSpec((tm, C0), lambda i: (i, 0)),             # src
                pl.BlockSpec((tm, V * C0), lambda i: (i, 0)),         # tgt
                pl.BlockSpec((3, tm, V), lambda i: (0, i, 0)),        # candidates^T
                _full_spec(w1s), _full_spec(w1t), _full_spec(b1e),
                _full_spec(w2d), _full_spec(b2e),
                _full_spec(w3d), _full_spec(b3e),
            ],
            out_specs=pl.BlockSpec((3, tm), lambda i: (0, i)),        # lane-dense out
        ),
        compiler_params=pltpu.CompilerParams(
            dimension_semantics=("parallel",),     # shards tiles across v7x's 2 TCs
            vmem_limit_bytes=48 * 1024 * 1024),    # safe on v7x (64 MiB physical)
        cost_estimate=pl.CostEstimate(flops=flops, transcendentals=Mtot * Vp,
                                      bytes_accessed=bytes_accessed),
    )(src, tgt, cand, w1s, w1t, b1e, w2d, b2e, w3d, b3e)

    # ragged/padded tile columns (rows >= M) are garbage by construction; rows
    # are independent so they never touch valid outputs — just slice them off.
    return out[:, :M].T.reshape(B, N, 3)


# ----------------------------------------------------------------------------
# pure-JAX reference (mirrors the PyTorch forward exactly, f32 everywhere)
# ----------------------------------------------------------------------------
def cpg_forward_reference(src_feat, tgt_feat, candidates, params, r, s):
    B, N, C, _ = candidates.shape
    G = int(2 * r / s + 1)
    src_vol = jnp.broadcast_to(src_feat.reshape(B, N, 1, 1, 1, 32),
                               (B, N, G, G, G, 32))
    tgt_vol = tgt_feat.reshape(B, N, G, G, G, 32)
    cost = src_vol - tgt_vol
    x = jnp.transpose(cost, (0, 1, 5, 2, 3, 4)).reshape(B * N, 32, G, G, G)
    for li, (w, b) in enumerate(params):
        x = lax.conv_general_dilated(
            x, w, window_strides=(1, 1, 1), padding=[(1, 1)] * 3,
            dimension_numbers=('NCDHW', 'OIDHW', 'NCDHW'),
            precision=lax.Precision.HIGHEST)
        x = x + b.reshape(1, -1, 1, 1, 1)
        if li < len(params) - 1:
            x = jnp.where(x > 0, x, 0.01 * x)     # LeakyReLU(0.01)
    x = x.reshape(B, N, C)
    wts = jnp.tanh(x)
    return jnp.sum(wts[..., None] * candidates, axis=-2)


def init_params(key):
    """Deterministic synthetic Conv3d params: 32->16, 16->4, 4->1, k=3."""
    specs = [(16, 32), (4, 16), (1, 4)]
    params = []
    for i, (co, ci) in enumerate(specs):
        kw, kb = jax.random.split(jax.random.fold_in(key, i))
        w = jax.random.normal(kw, (co, ci, 3, 3, 3), jnp.float32) * 0.05
        b = jax.random.normal(kb, (co,), jnp.float32) * 0.05
        params.append((w, b))
    return params


if __name__ == "__main__":
    B, N = 2, 8
    r, s = 1.0, 1.0                    # grid_size = int(2*r/s + 1) = 3
    G = int(2 * r / s + 1)
    V = G ** 3                         # 27 candidates per point

    key = jax.random.PRNGKey(0)
    k_src, k_tgt, k_cand, k_par = jax.random.split(key, 4)

    src_feat = jax.random.normal(k_src, (B, N, 32), jnp.float32) * 0.5
    tgt_feat = jax.random.normal(k_tgt, (B, N, G, G, G, 32), jnp.float32) * 0.5
    candidates = jax.random.normal(k_cand, (B, N, V, 3), jnp.float32)
    params = init_params(k_par)

    out = cpg_forward_pallas(src_feat, tgt_feat, candidates, params, r, s)
    out = jax.block_until_ready(out)

    ref = cpg_forward_reference(src_feat, tgt_feat, candidates, params, r, s)
    # tolerance accounts for bf16 matmul operands (accumulation kept in f32)
    np.testing.assert_allclose(np.asarray(out), np.asarray(ref),
                               rtol=5e-2, atol=2e-2)
    assert out.shape == (B, N, 3)
    print("KERNEL_OK")
</pallas_src>

<mosaic_0001>
module attributes {stable_mosaic.version = 11 : i64} {
  func.func @_cpg_kernel(%arg0: i32, %arg1: memref<16x32xf32, #tpu.memory_space<vmem>>, %arg2: memref<16x864xf32, #tpu.memory_space<vmem>>, %arg3: memref<3x16x27xbf16, #tpu.memory_space<vmem>>, %arg4: memref<32x512xbf16, #tpu.memory_space<vmem>>, %arg5: memref<864x512xbf16, #tpu.memory_space<vmem>>, %arg6: memref<1x512xf32, #tpu.memory_space<vmem>>, %arg7: memref<512x128xbf16, #tpu.memory_space<vmem>>, %arg8: memref<1x128xf32, #tpu.memory_space<vmem>>, %arg9: memref<128x32xbf16, #tpu.memory_space<vmem>>, %arg10: memref<1x32xf32, #tpu.memory_space<vmem>>, %arg11: memref<3x16xf32, #tpu.memory_space<vmem>>) attributes {dimension_semantics = [#tpu.dimension_semantics<parallel>], iteration_bounds = array<i64: 1>, scalar_prefetch = 0 : i64, scratch_operands = 0 : i64, tpu.core_type = #tpu.core_type<tc>, window_params = [{transform_indices = @transform_0, window_bounds = array<i64: 16, 32>}, {transform_indices = @transform_1, window_bounds = array<i64: 16, 864>}, {transform_indices = @transform_2, window_bounds = array<i64: 3, 16, 27>}, {pipeline_mode = #tpu.pipeline_mode<synchronous>, transform_indices = @transform_3, window_bounds = array<i64: 32, 512>}, {pipeline_mode = #tpu.pipeline_mode<synchronous>, transform_indices = @transform_4, window_bounds = array<i64: 864, 512>}, {pipeline_mode = #tpu.pipeline_mode<synchronous>, transform_indices = @transform_5, window_bounds = array<i64: 1, 512>}, {pipeline_mode = #tpu.pipeline_mode<synchronous>, transform_indices = @transform_6, window_bounds = array<i64: 512, 128>}, {pipeline_mode = #tpu.pipeline_mode<synchronous>, transform_indices = @transform_7, window_bounds = array<i64: 1, 128>}, {pipeline_mode = #tpu.pipeline_mode<synchronous>, transform_indices = @transform_8, window_bounds = array<i64: 128, 32>}, {pipeline_mode = #tpu.pipeline_mode<synchronous>, transform_indices = @transform_9, window_bounds = array<i64: 1, 32>}, {transform_indices = @transform_10, window_bounds = array<i64: 3, 16>}]} {
    %c0 = arith.constant 0 : index
    %c0_0 = arith.constant 0 : index
    %0 = vector.load %arg1[%c0, %c0_0] : memref<16x32xf32, #tpu.memory_space<vmem>>, vector<16x32xf32>
    %1 = arith.truncf %0 : vector<16x32xf32> to vector<16x32xbf16>
    %c0_1 = arith.constant 0 : index
    %c0_2 = arith.constant 0 : index
    %2 = vector.load %arg2[%c0_1, %c0_2] : memref<16x864xf32, #tpu.memory_space<vmem>>, vector<16x864xf32>
    %3 = arith.truncf %2 : vector<16x864xf32> to vector<16x864xbf16>
    %c0_3 = arith.constant 0 : index
    %c0_4 = arith.constant 0 : index
    %4 = vector.load %arg4[%c0_3, %c0_4] : memref<32x512xbf16, #tpu.memory_space<vmem>>, vector<32x512xbf16>
    %cst = arith.constant dense<0.000000e+00> : vector<16x512xf32>
    %5 = tpu.matmul %1, %4, %cst {dimension_numbers = #tpu.dot_dimension_numbers<[1], [0], [0], [1], [0, 0, 1, 1], [], []>} : vector<16x32xbf16>, vector<32x512xbf16>, vector<16x512xf32> -> vector<16x512xf32>
    %c0_5 = arith.constant 0 : index
    %c0_6 = arith.constant 0 : index
    %6 = vector.load %arg5[%c0_5, %c0_6] : memref<864x512xbf16, #tpu.memory_space<vmem>>, vector<864x512xbf16>
    %cst_7 = arith.constant dense<0.000000e+00> : vector<16x512xf32>
    %7 = tpu.matmul %3, %6, %cst_7 {dimension_numbers = #tpu.dot_dimension_numbers<[1], [0], [0], [1], [0, 0, 1, 1], [], []>} : vector<16x864xbf16>, vector<864x512xbf16>, vector<16x512xf32> -> vector<16x512xf32>
    %8 = arith.subf %5, %7 : vector<16x512xf32>
    %c0_8 = arith.constant 0 : index
    %c0_9 = arith.constant 0 : index
    %9 = vector.load %arg6[%c0_8, %c0_9] : memref<1x512xf32, #tpu.memory_space<vmem>>, vector<1x512xf32>
    %10 = vector.broadcast %9 : vector<1x512xf32> to vector<16x512xf32>
    %11 = arith.addf %8, %10 : vector<16x512xf32>
    %cst_10 = arith.constant 0.00999999977 : f32
    %12 = vector.broadcast %cst_10 : f32 to vector<16x512xf32>
    %13 = arith.mulf %12, %11 : vector<16x512xf32>
    %14 = arith.maximumf %11, %13 : vector<16x512xf32>
    %15 = arith.truncf %14 : vector<16x512xf32> to vector<16x512xbf16>
    %c0_11 = arith.constant 0 : index
    %c0_12 = arith.constant 0 : index
    %16 = vector.load %arg7[%c0_11, %c0_12] : memref<512x128xbf16, #tpu.memory_space<vmem>>, vector<512x128xbf16>
    %cst_13 = arith.constant dense<0.000000e+00> : vector<16x128xf32>
    %17 = tpu.matmul %15, %16, %cst_13 {dimension_numbers = #tpu.dot_dimension_numbers<[1], [0], [0], [1], [0, 0, 1, 1], [], []>} : vector<16x512xbf16>, vector<512x128xbf16>, vector<16x128xf32> -> vector<16x128xf32>
    %c0_14 = arith.constant 0 : index
    %c0_15 = arith.constant 0 : index
    %18 = vector.load %arg8[%c0_14, %c0_15] : memref<1x128xf32, #tpu.memory_space<vmem>>, vector<1x128xf32>
    %19 = vector.broadcast %18 : vector<1x128xf32> to vector<16x128xf32>
    %20 = arith.addf %17, %19 : vector<16x128xf32>
    %cst_16 = arith.constant 0.00999999977 : f32
    %21 = vector.broadcast %cst_16 : f32 to vector<16x128xf32>
    %22 = arith.mulf %21, %20 : vector<16x128xf32>
    %23 = arith.maximumf %20, %22 : vector<16x128xf32>
    %24 = arith.truncf %23 : vector<16x128xf32> to vector<16x128xbf16>
    %c0_17 = arith.constant 0 : index
    %c0_18 = arith.constant 0 : index
    %25 = vector.load %arg9[%c0_17, %c0_18] : memref<128x32xbf16, #tpu.memory_space<vmem>>, vector<128x32xbf16>
    %cst_19 = arith.constant dense<0.000000e+00> : vector<16x32xf32>
    %26 = tpu.matmul %24, %25, %cst_19 {dimension_numbers = #tpu.dot_dimension_numbers<[1], [0], [0], [1], [0, 0, 1, 1], [], []>} : vector<16x128xbf16>, vector<128x32xbf16>, vector<16x32xf32> -> vector<16x32xf32>
    %c0_20 = arith.constant 0 : index
    %c0_21 = arith.constant 0 : index
    %27 = vector.load %arg10[%c0_20, %c0_21] : memref<1x32xf32, #tpu.memory_space<vmem>>, vector<1x32xf32>
    %28 = vector.broadcast %27 : vector<1x32xf32> to vector<16x32xf32>
    %29 = arith.addf %26, %28 : vector<16x32xf32>
    %30 = math.tanh %29 : vector<16x32xf32>
    %c0_22 = arith.constant 0 : index
    %c0_23 = arith.constant 0 : index
    %c0_24 = arith.constant 0 : index
    %31 = vector.load %arg3[%c0_22, %c0_23, %c0_24] : memref<3x16x27xbf16, #tpu.memory_space<vmem>>, vector<3x16x27xbf16>
    %32 = arith.extf %31 : vector<3x16x27xbf16> to vector<3x16x27xf32>
    %33 = vector.extract_strided_slice %30 {offsets = [0, 0], sizes = [16, 27], strides = [1, 1]} : vector<16x32xf32> to vector<16x27xf32>
    %34 = vector.shape_cast %33 : vector<16x27xf32> to vector<1x16x27xf32>
    %35 = vector.broadcast %34 : vector<1x16x27xf32> to vector<3x16x27xf32>
    %36 = arith.mulf %32, %35 : vector<3x16x27xf32>
    %cst_25 = arith.constant dense<0.000000e+00> : vector<3x16xf32>
    %37 = vector.multi_reduction <add>, %36, %cst_25 [2] : vector<3x16x27xf32> to vector<3x16xf32>
    %c0_26 = arith.constant 0 : index
    %c0_27 = arith.constant 0 : index
    %38 = vector.load %arg11[%c0_26, %c0_27] : memref<3x16xf32, #tpu.memory_space<vmem>>, vector<3x16xf32>
    tpu.vector_store %arg11[%c0_26, %c0_27], %37 {strides = array<i32>} : memref<3x16xf32, #tpu.memory_space<vmem>>, vector<3x16xf32>,
    return
  }
  func.func @transform_0(%arg0: i32) -> (i32, i32) {
    %c0_i32 = arith.constant 0 : i32
    %c0_i32_0 = arith.constant 0 : i32
    return %arg0, %c0_i32 : i32, i32
  }
  func.func @transform_1(%arg0: i32) -> (i32, i32) {
    %c0_i32 = arith.constant 0 : i32
    %c0_i32_0 = arith.constant 0 : i32
    return %arg0, %c0_i32 : i32, i32
  }
  func.func @transform_2(%arg0: i32) -> (i32, i32, i32) {
    %c0_i32 = arith.constant 0 : i32
    %c0_i32_0 = arith.constant 0 : i32
    %c0_i32_1 = arith.constant 0 : i32
    return %c0_i32, %arg0, %c0_i32_0 : i32, i32, i32
  }
  func.func @transform_3(%arg0: i32) -> (i32, i32) {
    %c0_i32 = arith.constant 0 : i32
    %c0_i32_0 = arith.constant 0 : i32
    %c0_i32_1 = arith.constant 0 : i32
    return %c0_i32, %c0_i32_0 : i32, i32
  }
  func.func @transform_4(%arg0: i32) -> (i32, i32) {
    %c0_i32 = arith.constant 0 : i32
    %c0_i32_0 = arith.constant 0 : i32
    %c0_i32_1 = arith.constant 0 : i32
    return %c0_i32, %c0_i32_0 : i32, i32
  }
  func.func @transform_5(%arg0: i32) -> (i32, i32) {
    %c0_i32 = arith.constant 0 : i32
    %c0_i32_0 = arith.constant 0 : i32
    %c0_i32_1 = arith.constant 0 : i32
    return %c0_i32, %c0_i32_0 : i32, i32
  }
  func.func @transform_6(%arg0: i32) -> (i32, i32) {
    %c0_i32 = arith.constant 0 : i32
    %c0_i32_0 = arith.constant 0 : i32
    %c0_i32_1 = arith.constant 0 : i32
    return %c0_i32, %c0_i32_0 : i32, i32
  }
  func.func @transform_7(%arg0: i32) -> (i32, i32) {
    %c0_i32 = arith.constant 0 : i32
    %c0_i32_0 = arith.constant 0 : i32
    %c0_i32_1 = arith.constant 0 : i32
    return %c0_i32, %c0_i32_0 : i32, i32
  }
  func.func @transform_8(%arg0: i32) -> (i32, i32) {
    %c0_i32 = arith.constant 0 : i32
    %c0_i32_0 = arith.constant 0 : i32
    %c0_i32_1 = arith.constant 0 : i32
    return %c0_i32, %c0_i32_0 : i32, i32
  }
  func.func @transform_9(%arg0: i32) -> (i32, i32) {
    %c0_i32 = arith.constant 0 : i32
    %c0_i32_0 = arith.constant 0 : i32
    %c0_i32_1 = arith.constant 0 : i32
    return %c0_i32, %c0_i32_0 : i32, i32
  }
  func.func @transform_10(%arg0: i32) -> (i32, i32) {
    %c0_i32 = arith.constant 0 : i32
    %c0_i32_0 = arith.constant 0 : i32
    return %c0_i32, %arg0 : i32, i32
  }
}

</mosaic_0001>

<llo_original>
// kernel: tpu_custom_call.1
$region0: #{tpu_custom_call.1}
  #allocation0 [shape = 'u32[]', space=smem, size = 0x4, offset = 0x4, fixed_abs, tag = 'smem constant byte address 0x4 - core index']
  #allocation1 [shape = 'u32[72,128]{1,0:T(1,128)}', space=vmem, size = 0x9000, scoped, tag = 'internal scratch']
  %s0 = inlined_call_operand.vmem [shape: f32[16,32], index: 0, kind: input, shape index: {}]
  %s1 = inlined_call_operand.hbm [shape: f32[16,864], index: 1, kind: input, shape index: {}]
  %s2 = inlined_call_operand.hbm [shape: bf16[3,16,27], index: 2, kind: input, shape index: {}]
  %s3 = inlined_call_operand.vmem [shape: bf16[32,512], index: 3, kind: input, shape index: {}]
  %s4 = inlined_call_operand.hbm [shape: bf16[864,512], index: 4, kind: input, shape index: {}]
  %s5 = inlined_call_operand.vmem [shape: f32[1,512], index: 5, kind: input, shape index: {}]
  %s6 = inlined_call_operand.hbm [shape: bf16[512,128], index: 6, kind: input, shape index: {}]
  %s7 = inlined_call_operand.vmem [shape: f32[1,128], index: 7, kind: input, shape index: {}]
  %s8 = inlined_call_operand.vmem [shape: bf16[128,32], index: 8, kind: input, shape index: {}]
  %s9 = inlined_call_operand.vmem [shape: f32[1,32], index: 9, kind: input, shape index: {}]
  %s10 = inlined_call_operand.hbm [shape: f32[3,16], index: 10, kind: output, shape index: {}]
  %s11 = sld [smem:[#allocation0]]
  $region66: #{tpu_custom_call.1} parent=0
    _
  %s13 = ssub.s32 1, %s11
  %s14 = scalar_select 0, %s13, %s11
  $region1: #{tpu_custom_call.1} parent=0
    #allocation2 [shape = 'u8[57344]{0}', space=vmem, size = 0xe000, scoped, tag = 'input window, operand 1, single buffered']
    #allocation3 [shape = 's32[1]{0}', space=sflag, size = 0x4, scoped, tag = 'scoped memory for tpu_custom_call.1']
    #allocation4 [shape = 's32[1]{0}', space=sflag, size = 0x4, scoped, tag = 'scoped memory for tpu_custom_call.1']
    #allocation5 [shape = 'u8[12288]{0}', space=vmem, size = 0x3000, scoped, tag = 'input window, operand 2, single buffered']
    #allocation6 [shape = 's32[1]{0}', space=sflag, size = 0x4, scoped, tag = 'scoped memory for tpu_custom_call.1']
    #allocation7 [shape = 'u8[884736]{0}', space=vmem, size = 0xd8000, scoped, tag = 'input window, operand 4, single buffered']
    #allocation8 [shape = 'u8[131072]{0}', space=vmem, size = 0x20000, scoped, tag = 'input window, operand 6, single buffered']
    #allocation9 [shape = 's32[1]{0}', space=sflag, size = 0x4, scoped, tag = 'scoped memory for tpu_custom_call.1']
    #allocation10 [shape = 'u8[2048]{0}', space=vmem, size = 0x800, scoped, tag = 'output window, operand 0, single buffered']
    %15 = vsyncpa [#allocation3], 0
    %16 = vsyncpa [#allocation6], 0
    %17 = vsyncpa [#allocation9], 0
    %18 = vsyncpa [#allocation4], 0
    // Predicated region
    $region2: #{tpu_custom_call.1} parent=1 // pred_check
      _
    $region3: #{tpu_custom_call.1} parent=1 // pred_check_branch
      %20 = sbr.rel (0) target = $region5
    $region4: #{tpu_custom_call.1} parent=1 // pred_region
      _
    $region5: #{tpu_custom_call.1} parent=1 // pred_fallthru
      _
    // Predicated region
    $region6: #{tpu_custom_call.1} parent=1 // pred_check
      _
    $region7: #{tpu_custom_call.1} parent=1 // pred_check_branch
      %22 = sbr.rel (0) target = $region9
    $region8: #{tpu_custom_call.1} parent=1 // pred_region
      %24 = vsyncadd [#allocation3], 0
      %s25 = sshll.u32 %s1, 4
      %s26 = int_to_ptr.hbm [resolvable:$true] %s25
      %s27 = sshll.u32 [#allocation2], 4
      %s28 = int_to_ptr.vmem [resolvable:$true] %s27
      %33 = dma.hbm_to_vmem [thread:$0]  %s26, 1792, %s28, [#allocation3], 896, 896, 56
    $region9: #{tpu_custom_call.1} parent=1 // pred_fallthru
      _
    // Predicated region
    $region10: #{tpu_custom_call.1} parent=1 // pred_check
      _
    $region11: #{tpu_custom_call.1} parent=1 // pred_check_branch
      %35 = sbr.rel (0) target = $region13
    $region12: #{tpu_custom_call.1} parent=1 // pred_region
      %37 = vsyncadd [#allocation6], 0
      %s38 = sshll.u32 %s2, 4
      %s39 = int_to_ptr.hbm [resolvable:$true] %s38
      %s40 = sshll.u32 [#allocation5], 4
      %s41 = int_to_ptr.vmem [resolvable:$true] %s40
      %46 = dma.hbm_to_vmem [thread:$0]  %s39, 384, %s41, [#allocation6], 64, 64, 4
    $region13: #{tpu_custom_call.1} parent=1 // pred_fallthru
      _
    // Predicated region
    $region14: #{tpu_custom_call.1} parent=1 // pred_check
      _
    $region15: #{tpu_custom_call.1} parent=1 // pred_check_branch
      %48 = sbr.rel (0) target = $region17
    $region16: #{tpu_custom_call.1} parent=1 // pred_region
      _
    $region17: #{tpu_custom_call.1} parent=1 // pred_fallthru
      _
    // Predicated region
    $region18: #{tpu_custom_call.1} parent=1 // pred_check
      _
    $region19: #{tpu_custom_call.1} parent=1 // pred_check_branch
      %50 = sbr.rel (0) target = $region21
    $region20: #{tpu_custom_call.1} parent=1 // pred_region
      %52 = vsyncadd [#allocation6], 0
      %s53 = sshll.u32 %s4, 4
      %s54 = int_to_ptr.hbm [resolvable:$true] %s53
      %s55 = sshll.u32 [#allocation7], 4
      %s56 = int_to_ptr.vmem [resolvable:$true] %s55
      %61 = dma.hbm_to_vmem [thread:$0]  %s54, 27648, %s56, [#allocation6], 256, 256, 16
    $region21: #{tpu_custom_call.1} parent=1 // pred_fallthru
      _
    // Predicated region
    $region22: #{tpu_custom_call.1} parent=1 // pred_check
      _
    $region23: #{tpu_custom_call.1} parent=1 // pred_check_branch
      %63 = sbr.rel (0) target = $region25
    $region24: #{tpu_custom_call.1} parent=1 // pred_region
      _
    $region25: #{tpu_custom_call.1} parent=1 // pred_fallthru
      _
    // Predicated region
    $region26: #{tpu_custom_call.1} parent=1 // pred_check
      _
    $region27: #{tpu_custom_call.1} parent=1 // pred_check_branch
      %65 = sbr.rel (0) target = $region29
    $region28: #{tpu_custom_call.1} parent=1 // pred_region
      %67 = vsyncadd [#allocation9], 0
      %s68 = sshll.u32 %s6, 4
      %s69 = int_to_ptr.hbm [resolvable:$true] %s68
      %s70 = sshll.u32 [#allocation8], 4
      %s71 = int_to_ptr.vmem [resolvable:$true] %s70
      %76 = dma.hbm_to_vmem [thread:$0]  %s69, 4096, %s71, [#allocation9], 64, 64, 4
    $region29: #{tpu_custom_call.1} parent=1 // pred_fallthru
      _
    // Predicated region
    $region30: #{tpu_custom_call.1} parent=1 // pred_check
      _
    $region31: #{tpu_custom_call.1} parent=1 // pred_check_branch
      %78 = sbr.rel (0) target = $region33
    $region32: #{tpu_custom_call.1} parent=1 // pred_region
      _
    $region33: #{tpu_custom_call.1} parent=1 // pred_fallthru
      _
    // Predicated region
    $region34: #{tpu_custom_call.1} parent=1 // pred_check
      _
    $region35: #{tpu_custom_call.1} parent=1 // pred_check_branch
      %80 = sbr.rel (0) target = $region37
    $region36: #{tpu_custom_call.1} parent=1 // pred_region
      _
    $region37: #{tpu_custom_call.1} parent=1 // pred_fallthru
      _
    // Predicated region
    $region38: #{tpu_custom_call.1} parent=1 // pred_check
      _
    $region39: #{tpu_custom_call.1} parent=1 // pred_check_branch
      %82 = sbr.rel (0) target = $region41
    $region40: #{tpu_custom_call.1} parent=1 // pred_region
      _
    $region41: #{tpu_custom_call.1} parent=1 // pred_fallthru
      _
    // Predicated region
    $region42: #{tpu_custom_call.1} parent=1 // pred_check
      _
    $region43: #{tpu_custom_call.1} parent=1 // pred_check_branch
      %84 = sbr.rel (0) target = $region45
    $region44: #{tpu_custom_call.1} parent=1 // pred_region
      %86 = dma.done [#allocation3], 1792
    $region45: #{tpu_custom_call.1} parent=1 // pred_fallthru
      _
    // Predicated region
    $region46: #{tpu_custom_call.1} parent=1 // pred_check
      _
    $region47: #{tpu_custom_call.1} parent=1 // pred_check_branch
      %88 = sbr.rel (0) target = $region49
    $region48: #{tpu_custom_call.1} parent=1 // pred_region
      %90 = dma.done [#allocation6], 384
    $region49: #{tpu_custom_call.1} parent=1 // pred_fallthru
      _
    // Predicated region
    $region50: #{tpu_custom_call.1} parent=1 // pred_check
      _
    $region51: #{tpu_custom_call.1} parent=1 // pred_check_branch
      %92 = sbr.rel (0) target = $region53
    $region52: #{tpu_custom_call.1} parent=1 // pred_region
      %94 = dma.done [#allocation6], 27648
    $region53: #{tpu_custom_call.1} parent=1 // pred_fallthru
      _
    // Predicated region
    $region54: #{tpu_custom_call.1} parent=1 // pred_check
      _
    $region55: #{tpu_custom_call.1} parent=1 // pred_check_branch
      %96 = sbr.rel (0) target = $region57
    $region56: #{tpu_custom_call.1} parent=1 // pred_region
      %98 = dma.done [#allocation9], 4096
    $region57: #{tpu_custom_call.1} parent=1 // pred_fallthru
      _
    %v100 = vld [vmem:[%s0] sm:$0xff]
    %v101 = vld [vmem:[%s0 + $0x8] sm:$0xff]
    %v102 = vpack.c.bf16 %v101, %v100
    %v103 = vld [vmem:[#allocation2] sm:$0xff]
    %v104 = vld [vmem:[#allocation2 + $0x8] sm:$0xff]
    %v105 = vld [vmem:[#allocation2 + $0x10] sm:$0xff]
    %v106 = vld [vmem:[#allocation2 + $0x18] sm:$0xff]
    %v107 = vld [vmem:[#allocation2 + $0x20] sm:$0xff]
    %v108 = vld [vmem:[#allocation2 + $0x28] sm:$0xff]
    %v109 = vld [vmem:[#allocation2 + $0x30] sm:$0xff]
    %v110 = vld [vmem:[#allocation2 + $0x38] sm:$0xff]
    %v111 = vld [vmem:[#allocation2 + $0x40] sm:$0xff]
    %v112 = vld [vmem:[#allocation2 + $0x48] sm:$0xff]
    %v113 = vld [vmem:[#allocation2 + $0x50] sm:$0xff]
    %v114 = vld [vmem:[#allocation2 + $0x58] sm:$0xff]
    %v115 = vld [vmem:[#allocation2 + $0x60] sm:$0xff]
    %v116 = vld [vmem:[#allocation2 + $0x68] sm:$0xff]
    %v117 = vpack.c.bf16 %v110, %v103
    %v118 = vpack.c.bf16 %v111, %v104
    %v119 = vpack.c.bf16 %v112, %v105
    %v120 = vpack.c.bf16 %v113, %v106
    %v121 = vpack.c.bf16 %v114, %v107
    %v122 = vpack.c.bf16 %v115, %v108
    %v123 = vpack.c.bf16 %v116, %v109
    %v124 = vld [vmem:[%s3] sm:$0xff]
    %v125 = vld [vmem:[%s3 + $0x8] sm:$0xff]
    %v126 = vld [vmem:[%s3 + $0x10] sm:$0xff]
    %v127 = vld [vmem:[%s3 + $0x18] sm:$0xff]
    %v128 = vld [vmem:[%s3 + $0x20] sm:$0xff]
    %v129 = vld [vmem:[%s3 + $0x28] sm:$0xff]
    %v130 = vld [vmem:[%s3 + $0x30] sm:$0xff]
    %v131 = vld [vmem:[%s3 + $0x38] sm:$0xff]
    %v140 = vunpack.c.l.b16 %v124
    %v141 = vunpack.c.h.b16 %v124
    %v142 = vunpack.c.l.b16 %v125
    %v143 = vunpack.c.h.b16 %v125
    %v144 = vunpack.c.l.b16 %v126
    %v145 = vunpack.c.h.b16 %v126
    %v146 = vunpack.c.l.b16 %v127
    %v147 = vunpack.c.h.b16 %v127
    %v148 = vunpack.c.l.b16 %v128
    %v149 = vunpack.c.h.b16 %v128
    %v150 = vunpack.c.l.b16 %v129
    %v151 = vunpack.c.h.b16 %v129
    %v152 = vunpack.c.l.b16 %v130
    %v153 = vunpack.c.h.b16 %v130
    %v154 = vunpack.c.l.b16 %v131
    %v155 = vunpack.c.h.b16 %v131
    %v156 = vpack.c.b16 %v144, %v140
    %v157 = vpack.c.b16 %v145, %v141
    %v158 = vpack.c.b16 %v146, %v142
    %v159 = vpack.c.b16 %v147, %v143
    %v160 = vpack.c.b16 %v152, %v148
    %v161 = vpack.c.b16 %v153, %v149
    %v162 = vpack.c.b16 %v154, %v150
    %v163 = vpack.c.b16 %v155, %v151
    %vm172 = vcmask 261120
    %v174 = vsel %vm172, %v102, 0
    %176 = vmatpush.bf16.msra.mxu0 0
    %177 = vmatpush.bf16.msra.mxu0 0
    %178 = vmatpush.bf16.msra.mxu0 0
    %179 = vmatpush.bf16.msra.mxu0 0
    %180 = vmatpush.bf16.msra.mxu0 0
    %181 = vmatpush.bf16.msra.mxu0 0
    %182 = vmatpush.bf16.msra.mxu0 %v160
    %183 = vmatpush.bf16.msra.mxu0 %v156
    %184 = vmatmul.bf16.gmra.mxu0 %v174
    %v185 = vpop.f32.mrf.mxu0
    %v186 = vadd.f32 0.0, %v185
    %v187 = vpop.f32.mrf.mxu0
    %v188 = vadd.f32 0.0, %v187
    %189 = vdwg.mxu0
    %190 = vmatpush.bf16.msra.mxu0 0
    %191 = vmatpush.bf16.msra.mxu0 0
    %192 = vmatpush.bf16.msra.mxu0 0
    %193 = vmatpush.bf16.msra.mxu0 0
    %194 = vmatpush.bf16.msra.mxu0 0
    %195 = vmatpush.bf16.msra.mxu0 0
    %196 = vmatpush.bf16.msra.mxu0 %v161
    %197 = vmatpush.bf16.msra.mxu0 %v157
    %198 = vmatmul.bf16.gmra.mxu0 %v174
    %v199 = vpop.f32.mrf.mxu0
    %v200 = vadd.f32 0.0, %v199
    %v201 = vpop.f32.mrf.mxu0
    %v202 = vadd.f32 0.0, %v201
    %203 = vdwg.mxu0
    %204 = vmatpush.bf16.msra.mxu0 0
    %205 = vmatpush.bf16.msra.mxu0 0
    %206 = vmatpush.bf16.msra.mxu0 0
    %207 = vmatpush.bf16.msra.mxu0 0
    %208 = vmatpush.bf16.msra.mxu0 0
    %209 = vmatpush.bf16.msra.mxu0 0
    %210 = vmatpush.bf16.msra.mxu0 %v162
    %211 = vmatpush.bf16.msra.mxu0 %v158
    %212 = vmatmul.bf16.gmra.mxu0 %v174
    %v213 = vpop.f32.mrf.mxu0
    %v214 = vadd.f32 0.0, %v213
    %v215 = vpop.f32.mrf.mxu0
    %v216 = vadd.f32 0.0, %v215
    %217 = vdwg.mxu0
    %218 = vmatpush.bf16.msra.mxu0 0
    %219 = vmatpush.bf16.msra.mxu0 0
    %220 = vmatpush.bf16.msra.mxu0 0
    %221 = vmatpush.bf16.msra.mxu0 0
    %222 = vmatpush.bf16.msra.mxu0 0
    %223 = vmatpush.bf16.msra.mxu0 0
    %224 = vmatpush.bf16.msra.mxu0 %v163
    %225 = vmatpush.bf16.msra.mxu0 %v159
    %226 = vmatmul.bf16.gmra.mxu0 %v174
    %v227 = vpop.f32.mrf.mxu0
    %v228 = vadd.f32 0.0, %v227
    %v229 = vpop.f32.mrf.mxu0
    %v230 = vadd.f32 0.0, %v229
    %231 = vdwg.mxu0
    %v232 = vld [vmem:[#allocation7] sm:$0xff]
    %v233 = vld [vmem:[#allocation7 + $0x8] sm:$0xff]
    %v234 = vld [vmem:[#allocation7 + $0x10] sm:$0xff]
    %v235 = vld [vmem:[#allocation7 + $0x18] sm:$0xff]
    %v236 = vld [vmem:[#allocation7 + $0x20] sm:$0xff]
    %v237 = vld [vmem:[#allocation7 + $0x28] sm:$0xff]
    %v238 = vld [vmem:[#allocation7 + $0x30] sm:$0xff]
    %v239 = vld [vmem:[#allocation7 + $0x38] sm:$0xff]
    %v240 = vld [vmem:[#allocation7 + $0x40] sm:$0xff]
    %v241 = vld [vmem:[#allocation7 + $0x48] sm:$0xff]
    %v242 = vld [vmem:[#allocation7 + $0x50] sm:$0xff]
    %v243 = vld [vmem:[#allocation7 + $0x58] sm:$0xff]
    %v244 = vld [vmem:[#allocation7 + $0x60] sm:$0xff]
    %v245 = vld [vmem:[#allocation7 + $0x68] sm:$0xff]
    %v246 = vld [vmem:[#allocation7 + $0x70] sm:$0xff]
    %v247 = vld [vmem:[#allocation7 + $0x78] sm:$0xff]
    %v248 = vld [vmem:[#allocation7 + $0x80] sm:$0xff]
    %v249 = vld [vmem:[#allocation7 + $0x88] sm:$0xff]
    %v250 = vld [vmem:[#allocation7 + $0x90] sm:$0xff]
    %v251 = vld [vmem:[#allocation7 + $0x98] sm:$0xff]
    %v252 = vld [vmem:[#allocation7 + $0xa0] sm:$0xff]
    %v253 = vld [vmem:[#allocation7 + $0xa8] sm:$0xff]
    %v254 = vld [vmem:[#allocation7 + $0xb0] sm:$0xff]
    %v255 = vld [vmem:[#allocation7 + $0xb8] sm:$0xff]
    %v256 = vld [vmem:[#allocation7 + $0xc0] sm:$0xff]
    %v257 = vld [vmem:[#allocation7 + $0xc8] sm:$0xff]
    %v258 = vld [vmem:[#allocation7 + $0xd0] sm:$0xff]
    %v259 = vld [vmem:[#allocation7 + $0xd8] sm:$0xff]
    %v260 = vld [vmem:[#allocation7 + $0xe0] sm:$0xff]
    %v261 = vld [vmem:[#allocation7 + $0xe8] sm:$0xff]
    %v262 = vld [vmem:[#allocation7 + $0xf0] sm:$0xff]
    %v263 = vld [vmem:[#allocation7 + $0xf8] sm:$0xff]
    %v264 = vld [vmem:[#allocation7 + $0x100] sm:$0xff]
    %v265 = vld [vmem:[#allocation7 + $0x108] sm:$0xff]
    %v266 = vld [vmem:[#allocation7 + $0x110] sm:$0xff]
    %v267 = vld [vmem:[#allocation7 + $0x118] sm:$0xff]
    %v268 = vld [vmem:[#allocation7 + $0x120] sm:$0xff]
    %v269 = vld [vmem:[#allocation7 + $0x128] sm:$0xff]
    %v270 = vld [vmem:[#allocation7 + $0x130] sm:$0xff]
    %v271 = vld [vmem:[#allocation7 + $0x138] sm:$0xff]
    %v272 = vld [vmem:[#allocation7 + $0x140] sm:$0xff]
    %v273 = vld [vmem:[#allocation7 + $0x148] sm:$0xff]
    %v274 = vld [vmem:[#allocation7 + $0x150] sm:$0xff]
    %v275 = vld [vmem:[#allocation7 + $0x158] sm:$0xff]
    %v276 = vld [vmem:[#allocation7 + $0x160] sm:$0xff]
    %v277 = vld [vmem:[#allocation7 + $0x168] sm:$0xff]
    %v278 = vld [vmem:[#allocation7 + $0x170] sm:$0xff]
    %v279 = vld [vmem:[#allocation7 + $0x178] sm:$0xff]
    %v280 = vld [vmem:[#allocation7 + $0x180] sm:$0xff]
    %v281 = vld [vmem:[#allocation7 + $0x188] sm:$0xff]
    %v282 = vld [vmem:[#allocation7 + $0x190] sm:$0xff]
    %v283 = vld [vmem:[#allocation7 + $0x198] sm:$0xff]
    %v284 = vld [vmem:[#allocation7 + $0x1a0] sm:$0xff]
    %v285 = vld [vmem:[#allocation7 + $0x1a8] sm:$0xff]
    %v286 = vld [vmem:[#allocation7 + $0x1b0] sm:$0xff]
    %v287 = vld [vmem:[#allocation7 + $0x1b8] sm:$0xff]
    %v288 = vld [vmem:[#allocation7 + $0x1c0] sm:$0xff]
    %v289 = vld [vmem:[#allocation7 + $0x1c8] sm:$0xff]
    %v290 = vld [vmem:[#allocation7 + $0x1d0] sm:$0xff]
    %v291 = vld [vmem:[#allocation7 + $0x1d8] sm:$0xff]
    %v292 = vld [vmem:[#allocation7 + $0x1e0] sm:$0xff]
    %v293 = vld [vmem:[#allocation7 + $0x1e8] sm:$0xff]
    %v294 = vld [vmem:[#allocation7 + $0x1f0] sm:$0xff]
    %v295 = vld [vmem:[#allocation7 + $0x1f8] sm:$0xff]
    %v296 = vld [vmem:[#allocation7 + $0x200] sm:$0xff]
    %v297 = vld [vmem:[#allocation7 + $0x208] sm:$0xff]
    %v298 = vld [vmem:[#allocation7 + $0x210] sm:$0xff]
    %v299 = vld [vmem:[#allocation7 + $0x218] sm:$0xff]
    %v300 = vld [vmem:[#allocation7 + $0x220] sm:$0xff]
    %v301 = vld [vmem:[#allocation7 + $0x228] sm:$0xff]
    %v302 = vld [vmem:[#allocation7 + $0x230] sm:$0xff]
    %v303 = vld [vmem:[#allocation7 + $0x238] sm:$0xff]
    %v304 = vld [vmem:[#allocation7 + $0x240] sm:$0xff]
    %v305 = vld [vmem:[#allocation7 + $0x248] sm:$0xff]
    %v306 = vld [vmem:[#allocation7 + $0x250] sm:$0xff]
    %v307 = vld [vmem:[#allocation7 + $0x258] sm:$0xff]
    %v308 = vld [vmem:[#allocation7 + $0x260] sm:$0xff]
    %v309 = vld [vmem:[#allocation7 + $0x268] sm:$0xff]
    %v310 = vld [vmem:[#allocation7 + $0x270] sm:$0xff]
    %v311 = vld [vmem:[#allocation7 + $0x278] sm:$0xff]
    %v312 = vld [vmem:[#allocation7 + $0x280] sm:$0xff]
    %v313 = vld [vmem:[#allocation7 + $0x288] sm:$0xff]
    %v314 = vld [vmem:[#allocation7 + $0x290] sm:$0xff]
    %v315 = vld [vmem:[#allocation7 + $0x298] sm:$0xff]
    %v316 = vld [vmem:[#allocation7 + $0x2a0] sm:$0xff]
    %v317 = vld [vmem:[#allocation7 + $0x2a8] sm:$0xff]
    %v318 = vld [vmem:[#allocation7 + $0x2b0] sm:$0xff]
    %v319 = vld [vmem:[#allocation7 + $0x2b8] sm:$0xff]
    %v320 = vld [vmem:[#allocation7 + $0x2c0] sm:$0xff]
    %v321 = vld [vmem:[#allocation7 + $0x2c8] sm:$0xff]
    %v322 = vld [vmem:[#allocation7 + $0x2d0] sm:$0xff]
    %v323 = vld [vmem:[#allocation7 + $0x2d8] sm:$0xff]
    %v324 = vld [vmem:[#allocation7 + $0x2e0] sm:$0xff]
    %v325 = vld [vmem:[#allocation7 + $0x2e8] sm:$0xff]
    %v326 = vld [vmem:[#allocation7 + $0x2f0] sm:$0xff]
    %v327 = vld [vmem:[#allocation7 + $0x2f8] sm:$0xff]
    %v328 = vld [vmem:[#allocation7 + $0x300] sm:$0xff]
    %v329 = vld [vmem:[#allocation7 + $0x308] sm:$0xff]
    %v330 = vld [vmem:[#allocation7 + $0x310] sm:$0xff]
    %v331 = vld [vmem:[#allocation7 + $0x318] sm:$0xff]
    %v332 = vld [vmem:[#allocation7 + $0x320] sm:$0xff]
    %v333 = vld [vmem:[#allocation7 + $0x328] sm:$0xff]
    %v334 = vld [vmem:[#allocation7 + $0x330] sm:$0xff]
    %v335 = vld [vmem:[#allocation7 + $0x338] sm:$0xff]
    %v336 = vld [vmem:[#allocation7 + $0x340] sm:$0xff]
    %v337 = vld [vmem:[#allocation7 + $0x348] sm:$0xff]
    %v338 = vld [vmem:[#allocation7 + $0x350] sm:$0xff]
    %v339 = vld [vmem:[#allocation7 + $0x358] sm:$0xff]
    %v340 = vld [vmem:[#allocation7 + $0x360] sm:$0xff]
    %v341 = vld [vmem:[#allocation7 + $0x368] sm:$0xff]
    %v342 = vld [vmem:[#allocation7 + $0x370] sm:$0xff]
    %v343 = vld [vmem:[#allocation7 + $0x378] sm:$0xff]
    %v344 = vld [vmem:[#allocation7 + $0x380] sm:$0xff]
    %v345 = vld [vmem:[#allocation7 + $0x388] sm:$0xff]
    %v346 = vld [vmem:[#allocation7 + $0x390] sm:$0xff]
    %v347 = vld [vmem:[#allocation7 + $0x398] sm:$0xff]
    %v348 = vld [vmem:[#allocation7 + $0x3a0] sm:$0xff]
    %v349 = vld [vmem:[#allocation7 + $0x3a8] sm:$0xff]
    %v350 = vld [vmem:[#allocation7 + $0x3b0] sm:$0xff]
    %v351 = vld [vmem:[#allocation7 + $0x3b8] sm:$0xff]
    %v352 = vld [vmem:[#allocation7 + $0x3c0] sm:$0xff]
    %v353 = vld [vmem:[#allocation7 + $0x3c8] sm:$0xff]
    %v354 = vld [vmem:[#allocation7 + $0x3d0] sm:$0xff]
    %v355 = vld [vmem:[#allocation7 + $0x3d8] sm:$0xff]
    %v356 = vld [vmem:[#allocation7 + $0x3e0] sm:$0xff]
    %v357 = vld [vmem:[#allocation7 + $0x3e8] sm:$0xff]
    %v358 = vld [vmem:[#allocation7 + $0x3f0] sm:$0xff]
    %v359 = vld [vmem:[#allocation7 + $0x3f8] sm:$0xff]
    %v360 = vld [vmem:[#allocation7 + $0x400] sm:$0xff]
    %v361 = vld [vmem:[#allocation7 + $0x408] sm:$0xff]
    %v362 = vld [vmem:[#allocation7 + $0x410] sm:$0xff]
    %v363 = vld [vmem:[#allocation7 + $0x418] sm:$0xff]
    %v364 = vld [vmem:[#allocation7 + $0x420] sm:$0xff]
    %v365 = vld [vmem:[#allocation7 + $0x428] sm:$0xff]
    %v366 = vld [vmem:[#allocation7 + $0x430] sm:$0xff]
    %v367 = vld [vmem:[#allocation7 + $0x438] sm:$0xff]
    %v368 = vld [vmem:[#allocation7 + $0x440] sm:$0xff]
    %v369 = vld [vmem:[#allocation7 + $0x448] sm:$0xff]
    %v370 = vld [vmem:[#allocation7 + $0x450] sm:$0xff]
    %v371 = vld [vmem:[#allocation7 + $0x458] sm:$0xff]
    %v372 = vld [vmem:[#allocation7 + $0x460] sm:$0xff]
    %v373 = vld [vmem:[#allocation7 + $0x468] sm:$0xff]
    %v374 = vld [vmem:[#allocation7 + $0x470] sm:$0xff]
    %v375 = vld [vmem:[#allocation7 + $0x478] sm:$0xff]
    %v376 = vld [vmem:[#allocation7 + $0x480] sm:$0xff]
    %v377 = vld [vmem:[#allocation7 + $0x488] sm:$0xff]
    %v378 = vld [vmem:[#allocation7 + $0x490] sm:$0xff]
    %v379 = vld [vmem:[#allocation7 + $0x498] sm:$0xff]
    %v380 = vld [vmem:[#allocation7 + $0x4a0] sm:$0xff]
    %v381 = vld [vmem:[#allocation7 + $0x4a8] sm:$0xff]
    %v382 = vld [vmem:[#allocation7 + $0x4b0] sm:$0xff]
    %v383 = vld [vmem:[#allocation7 + $0x4b8] sm:$0xff]
    %v384 = vld [vmem:[#allocation7 + $0x4c0] sm:$0xff]
    %v385 = vld [vmem:[#allocation7 + $0x4c8] sm:$0xff]
    %v386 = vld [vmem:[#allocation7 + $0x4d0] sm:$0xff]
    %v387 = vld [vmem:[#allocation7 + $0x4d8] sm:$0xff]
    %v388 = vld [vmem:[#allocation7 + $0x4e0] sm:$0xff]
    %v389 = vld [vmem:[#allocation7 + $0x4e8] sm:$0xff]
    %v390 = vld [vmem:[#allocation7 + $0x4f0] sm:$0xff]
    %v391 = vld [vmem:[#allocation7 + $0x4f8] sm:$0xff]
    %v392 = vld [vmem:[#allocation7 + $0x500] sm:$0xff]
    %v393 = vld [vmem:[#allocation7 + $0x508] sm:$0xff]
    %v394 = vld [vmem:[#allocation7 + $0x510] sm:$0xff]
    %v395 = vld [vmem:[#allocation7 + $0x518] sm:$0xff]
    %v396 = vld [vmem:[#allocation7 + $0x520] sm:$0xff]
    %v397 = vld [vmem:[#allocation7 + $0x528] sm:$0xff]
    %v398 = vld [vmem:[#allocation7 + $0x530] sm:$0xff]
    %v399 = vld [vmem:[#allocation7 + $0x538] sm:$0xff]
    %v400 = vld [vmem:[#allocation7 + $0x540] sm:$0xff]
    %v401 = vld [vmem:[#allocation7 + $0x548] sm:$0xff]
    %v402 = vld [vmem:[#allocation7 + $0x550] sm:$0xff]
    %v403 = vld [vmem:[#allocation7 + $0x558] sm:$0xff]
    %v404 = vld [vmem:[#allocation7 + $0x560] sm:$0xff]
    %v405 = vld [vmem:[#allocation7 + $0x568] sm:$0xff]
    %v406 = vld [vmem:[#allocation7 + $0x570] sm:$0xff]
    %v407 = vld [vmem:[#allocation7 + $0x578] sm:$0xff]
    %v408 = vld [vmem:[#allocation7 + $0x580] sm:$0xff]
    %v409 = vld [vmem:[#allocation7 + $0x588] sm:$0xff]
    %v410 = vld [vmem:[#allocation7 + $0x590] sm:$0xff]
    %v411 = vld [vmem:[#allocation7 + $0x598] sm:$0xff]
    %v412 = vld [vmem:[#allocation7 + $0x5a0] sm:$0xff]
    %v413 = vld [vmem:[#allocation7 + $0x5a8] sm:$0xff]
    %v414 = vld [vmem:[#allocation7 + $0x5b0] sm:$0xff]
    %v415 = vld [vmem:[#allocation7 + $0x5b8] sm:$0xff]
    %v416 = vld [vmem:[#allocation7 + $0x5c0] sm:$0xff]
    %v417 = vld [vmem:[#allocation7 + $0x5c8] sm:$0xff]
    %v418 = vld [vmem:[#allocation7 + $0x5d0] sm:$0xff]
    %v419 = vld [vmem:[#allocation7 + $0x5d8] sm:$0xff]
    %v420 = vld [vmem:[#allocation7 + $0x5e0] sm:$0xff]
    %v421 = vld [vmem:[#allocation7 + $0x5e8] sm:$0xff]
    %v422 = vld [vmem:[#allocation7 + $0x5f0] sm:$0xff]
    %v423 = vld [vmem:[#allocation7 + $0x5f8] sm:$0xff]
    %v424 = vld [vmem:[#allocation7 + $0x600] sm:$0xff]
    %v425 = vld [vmem:[#allocation7 + $0x608] sm:$0xff]
    %v426 = vld [vmem:[#allocation7 + $0x610] sm:$0xff]
    %v427 = vld [vmem:[#allocation7 + $0x618] sm:$0xff]
    %v428 = vld [vmem:[#allocation7 + $0x620] sm:$0xff]
    %v429 = vld [vmem:[#allocation7 + $0x628] sm:$0xff]
    %v430 = vld [vmem:[#allocation7 + $0x630] sm:$0xff]
    %v431 = vld [vmem:[#allocation7 + $0x638] sm:$0xff]
    %v432 = vld [vmem:[#allocation7 + $0x640] sm:$0xff]
    %v433 = vld [vmem:[#allocation7 + $0x648] sm:$0xff]
    %v434 = vld [vmem:[#allocation7 + $0x650] sm:$0xff]
    %v435 = vld [vmem:[#allocation7 + $0x658] sm:$0xff]
    %v436 = vld [vmem:[#allocation7 + $0x660] sm:$0xff]
    %v437 = vld [vmem:[#allocation7 + $0x668] sm:$0xff]
    %v438 = vld [vmem:[#allocation7 + $0x670] sm:$0xff]
    %v439 = vld [vmem:[#allocation7 + $0x678] sm:$0xff]
    %v440 = vld [vmem:[#allocation7 + $0x680] sm:$0xff]
    %v441 = vld [vmem:[#allocation7 + $0x688] sm:$0xff]
    %v442 = vld [vmem:[#allocation7 + $0x690] sm:$0xff]
    %v443 = vld [vmem:[#allocation7 + $0x698] sm:$0xff]
    %v444 = vld [vmem:[#allocation7 + $0x6a0] sm:$0xff]
    %v445 = vld [vmem:[#allocation7 + $0x6a8] sm:$0xff]
    %v446 = vld [vmem:[#allocation7 + $0x6b0] sm:$0xff]
    %v447 = vld [vmem:[#allocation7 + $0x6b8] sm:$0xff]
    %v664 = vunpack.c.l.b16 %v232
    %v665 = vunpack.c.h.b16 %v232
    %v666 = vunpack.c.l.b16 %v233
    %v667 = vunpack.c.h.b16 %v233
    %v668 = vunpack.c.l.b16 %v234
    %v669 = vunpack.c.h.b16 %v234
    %v670 = vunpack.c.l.b16 %v235
    %v671 = vunpack.c.h.b16 %v235
    %v672 = vunpack.c.l.b16 %v236
    %v673 = vunpack.c.h.b16 %v236
    %v674 = vunpack.c.l.b16 %v237
    %v675 = vunpack.c.h.b16 %v237
    %v676 = vunpack.c.l.b16 %v238
    %v677 = vunpack.c.h.b16 %v238
    %v678 = vunpack.c.l.b16 %v239
    %v679 = vunpack.c.h.b16 %v239
    %v680 = vunpack.c.l.b16 %v240
    %v681 = vunpack.c.h.b16 %v240
    %v682 = vunpack.c.l.b16 %v241
    %v683 = vunpack.c.h.b16 %v241
    %v684 = vunpack.c.l.b16 %v242
    %v685 = vunpack.c.h.b16 %v242
    %v686 = vunpack.c.l.b16 %v243
    %v687 = vunpack.c.h.b16 %v243
    %v688 = vunpack.c.l.b16 %v244
    %v689 = vunpack.c.h.b16 %v244
    %v690 = vunpack.c.l.b16 %v245
    %v691 = vunpack.c.h.b16 %v245
    %v692 = vunpack.c.l.b16 %v246
    %v693 = vunpack.c.h.b16 %v246
    %v694 = vunpack.c.l.b16 %v247
    %v695 = vunpack.c.h.b16 %v247
    %v696 = vunpack.c.l.b16 %v248
    %v697 = vunpack.c.h.b16 %v248
    %v698 = vunpack.c.l.b16 %v249
    %v699 = vunpack.c.h.b16 %v249
    %v700 = vunpack.c.l.b16 %v250
    %v701 = vunpack.c.h.b16 %v250
    %v702 = vunpack.c.l.b16 %v251
    %v703 = vunpack.c.h.b16 %v251
    %v704 = vunpack.c.l.b16 %v252
    %v705 = vunpack.c.h.b16 %v252
    %v706 = vunpack.c.l.b16 %v253
    %v707 = vunpack.c.h.b16 %v253
    %v708 = vunpack.c.l.b16 %v254
    %v709 = vunpack.c.h.b16 %v254
    %v710 = vunpack.c.l.b16 %v255
    %v711 = vunpack.c.h.b16 %v255
    %v712 = vunpack.c.l.b16 %v256
    %v713 = vunpack.c.h.b16 %v256
    %v714 = vunpack.c.l.b16 %v257
    %v715 = vunpack.c.h.b16 %v257
    %v716 = vunpack.c.l.b16 %v258
    %v717 = vunpack.c.h.b16 %v258
    %v718 = vunpack.c.l.b16 %v259
    %v719 = vunpack.c.h.b16 %v259
    %v720 = vunpack.c.l.b16 %v260
    %v721 = vunpack.c.h.b16 %v260
    %v722 = vunpack.c.l.b16 %v261
    %v723 = vunpack.c.h.b16 %v261
    %v724 = vunpack.c.l.b16 %v262
    %v725 = vunpack.c.h.b16 %v262
    %v726 = vunpack.c.l.b16 %v263
    %v727 = vunpack.c.h.b16 %v263
    %v728 = vunpack.c.l.b16 %v264
    %v729 = vunpack.c.h.b16 %v264
    %v730 = vunpack.c.l.b16 %v265
    %v731 = vunpack.c.h.b16 %v265
    %v732 = vunpack.c.l.b16 %v266
    %v733 = vunpack.c.h.b16 %v266
    %v734 = vunpack.c.l.b16 %v267
    %v735 = vunpack.c.h.b16 %v267
    %v736 = vunpack.c.l.b16 %v268
    %v737 = vunpack.c.h.b16 %v268
    %v738 = vunpack.c.l.b16 %v269
    %v739 = vunpack.c.h.b16 %v269
    %v740 = vunpack.c.l.b16 %v270
    %v741 = vunpack.c.h.b16 %v270
    %v742 = vunpack.c.l.b16 %v271
    %v743 = vunpack.c.h.b16 %v271
    %v744 = vunpack.c.l.b16 %v272
    %v745 = vunpack.c.h.b16 %v272
    %v746 = vunpack.c.l.b16 %v273
    %v747 = vunpack.c.h.b16 %v273
    %v748 = vunpack.c.l.b16 %v274
    %v749 = vunpack.c.h.b16 %v274
    %v750 = vunpack.c.l.b16 %v275
    %v751 = vunpack.c.h.b16 %v275
    %v752 = vunpack.c.l.b16 %v276
    %v753 = vunpack.c.h.b16 %v276
    %v754 = vunpack.c.l.b16 %v277
    %v755 = vunpack.c.h.b16 %v277
    %v756 = vunpack.c.l.b16 %v278
    %v757 = vunpack.c.h.b16 %v278
    %v758 = vunpack.c.l.b16 %v279
    %v759 = vunpack.c.h.b16 %v279
    %v760 = vunpack.c.l.b16 %v280
    %v761 = vunpack.c.h.b16 %v280
    %v762 = vunpack.c.l.b16 %v281
    %v763 = vunpack.c.h.b16 %v281
    %v764 = vunpack.c.l.b16 %v282
    %v765 = vunpack.c.h.b16 %v282
    %v766 = vunpack.c.l.b16 %v283
    %v767 = vunpack.c.h.b16 %v283
    %v768 = vunpack.c.l.b16 %v284
    %v769 = vunpack.c.h.b16 %v284
    %v770 = vunpack.c.l.b16 %v285
    %v771 = vunpack.c.h.b16 %v285
    %v772 = vunpack.c.l.b16 %v286
    %v773 = vunpack.c.h.b16 %v286
    %v774 = vunpack.c.l.b16 %v287
    %v775 = vunpack.c.h.b16 %v287
    %v776 = vunpack.c.l.b16 %v288
    %v777 = vunpack.c.h.b16 %v288
    %v778 = vunpack.c.l.b16 %v289
    %v779 = vunpack.c.h.b16 %v289
    %v780 = vunpack.c.l.b16 %v290
    %v781 = vunpack.c.h.b16 %v290
    %v782 = vunpack.c.l.b16 %v291
    %v783 = vunpack.c.h.b16 %v291
    %v784 = vunpack.c.l.b16 %v292
    %v785 = vunpack.c.h.b16 %v292
    %v786 = vunpack.c.l.b16 %v293
    %v787 = vunpack.c.h.b16 %v293
    %v788 = vunpack.c.l.b16 %v294
    %v789 = vunpack.c.h.b16 %v294
    %v790 = vunpack.c.l.b16 %v295
    %v791 = vunpack.c.h.b16 %v295
    %v792 = vunpack.c.l.b16 %v296
    %v793 = vunpack.c.h.b16 %v296
    %v794 = vunpack.c.l.b16 %v297
    %v795 = vunpack.c.h.b16 %v297
    %v796 = vunpack.c.l.b16 %v298
    %v797 = vunpack.c.h.b16 %v298
    %v798 = vunpack.c.l.b16 %v299
    %v799 = vunpack.c.h.b16 %v299
    %v800 = vunpack.c.l.b16 %v300
    %v801 = vunpack.c.h.b16 %v300
    %v802 = vunpack.c.l.b16 %v301
    %v803 = vunpack.c.h.b16 %v301
    %v804 = vunpack.c.l.b16 %v302
    %v805 = vunpack.c.h.b16 %v302
    %v806 = vunpack.c.l.b16 %v303
    %v807 = vunpack.c.h.b16 %v303
    %v808 = vunpack.c.l.b16 %v304
    %v809 = vunpack.c.h.b16 %v304
    %v810 = vunpack.c.l.b16 %v305
    %v811 = vunpack.c.h.b16 %v305
    %v812 = vunpack.c.l.b16 %v306
    %v813 = vunpack.c.h.b16 %v306
    %v814 = vunpack.c.l.b16 %v307
    %v815 = vunpack.c.h.b16 %v307
    %v816 = vunpack.c.l.b16 %v308
    %v817 = vunpack.c.h.b16 %v308
    %v818 = vunpack.c.l.b16 %v309
    %v819 = vunpack.c.h.b16 %v309
    %v820 = vunpack.c.l.b16 %v310
    %v821 = vunpack.c.h.b16 %v310
    %v822 = vunpack.c.l.b16 %v311
    %v823 = vunpack.c.h.b16 %v311
    %v824 = vunpack.c.l.b16 %v312
    %v825 = vunpack.c.h.b16 %v312
    %v826 = vunpack.c.l.b16 %v313
    %v827 = vunpack.c.h.b16 %v313
    %v828 = vunpack.c.l.b16 %v314
    %v829 = vunpack.c.h.b16 %v314
    %v830 = vunpack.c.l.b16 %v315
    %v831 = vunpack.c.h.b16 %v315
    %v832 = vunpack.c.l.b16 %v316
    %v833 = vunpack.c.h.b16 %v316
    %v834 = vunpack.c.l.b16 %v317
    %v835 = vunpack.c.h.b16 %v317
    %v836 = vunpack.c.l.b16 %v318
    %v837 = vunpack.c.h.b16 %v318
    %v838 = vunpack.c.l.b16 %v319
    %v839 = vunpack.c.h.b16 %v319
    %v840 = vunpack.c.l.b16 %v320
    %v841 = vunpack.c.h.b16 %v320
    %v842 = vunpack.c.l.b16 %v321
    %v843 = vunpack.c.h.b16 %v321
    %v844 = vunpack.c.l.b16 %v322
    %v845 = vunpack.c.h.b16 %v322
    %v846 = vunpack.c.l.b16 %v323
    %v847 = vunpack.c.h.b16 %v323
    %v848 = vunpack.c.l.b16 %v324
    %v849 = vunpack.c.h.b16 %v324
    %v850 = vunpack.c.l.b16 %v325
    %v851 = vunpack.c.h.b16 %v325
    %v852 = vunpack.c.l.b16 %v326
    %v853 = vunpack.c.h.b16 %v326
    %v854 = vunpack.c.l.b16 %v327
    %v855 = vunpack.c.h.b16 %v327
    %v856 = vunpack.c.l.b16 %v328
    %v857 = vunpack.c.h.b16 %v328
    %v858 = vunpack.c.l.b16 %v329
    %v859 = vunpack.c.h.b16 %v329
    %v860 = vunpack.c.l.b16 %v330
    %v861 = vunpack.c.h.b16 %v330
    %v862 = vunpack.c.l.b16 %v331
    %v863 = vunpack.c.h.b16 %v331
    %v864 = vunpack.c.l.b16 %v332
    %v865 = vunpack.c.h.b16 %v332
    %v866 = vunpack.c.l.b16 %v333
    %v867 = vunpack.c.h.b16 %v333
    %v868 = vunpack.c.l.b16 %v334
    %v869 = vunpack.c.h.b16 %v334
    %v870 = vunpack.c.l.b16 %v335
    %v871 = vunpack.c.h.b16 %v335
    %v872 = vunpack.c.l.b16 %v336
    %v873 = vunpack.c.h.b16 %v336
    %v874 = vunpack.c.l.b16 %v337
    %v875 = vunpack.c.h.b16 %v337
    %v876 = vunpack.c.l.b16 %v338
    %v877 = vunpack.c.h.b16 %v338
    %v878 = vunpack.c.l.b16 %v339
    %v879 = vunpack.c.h.b16 %v339
    %v880 = vunpack.c.l.b16 %v340
    %v881 = vunpack.c.h.b16 %v340
    %v882 = vunpack.c.l.b16 %v341
    %v883 = vunpack.c.h.b16 %v341
    %v884 = vunpack.c.l.b16 %v342
    %v885 = vunpack.c.h.b16 %v342
    %v886 = vunpack.c.l.b16 %v343
    %v887 = vunpack.c.h.b16 %v343
    %v888 = vunpack.c.l.b16 %v344
    %v889 = vunpack.c.h.b16 %v344
    %v890 = vunpack.c.l.b16 %v345
    %v891 = vunpack.c.h.b16 %v345
    %v892 = vunpack.c.l.b16 %v346
    %v893 = vunpack.c.h.b16 %v346
    %v894 = vunpack.c.l.b16 %v347
    %v895 = vunpack.c.h.b16 %v347
    %v896 = vunpack.c.l.b16 %v348
    %v897 = vunpack.c.h.b16 %v348
    %v898 = vunpack.c.l.b16 %v349
    %v899 = vunpack.c.h.b16 %v349
    %v900 = vunpack.c.l.b16 %v350
    %v901 = vunpack.c.h.b16 %v350
    %v902 = vunpack.c.l.b16 %v351
    %v903 = vunpack.c.h.b16 %v351
    %v904 = vunpack.c.l.b16 %v352
    %v905 = vunpack.c.h.b16 %v352
    %v906 = vunpack.c.l.b16 %v353
    %v907 = vunpack.c.h.b16 %v353
    %v908 = vunpack.c.l.b16 %v354
    %v909 = vunpack.c.h.b16 %v354
    %v910 = vunpack.c.l.b16 %v355
    %v911 = vunpack.c.h.b16 %v355
    %v912 = vunpack.c.l.b16 %v356
    %v913 = vunpack.c.h.b16 %v356
    %v914 = vunpack.c.l.b16 %v357
    %v915 = vunpack.c.h.b16 %v357
    %v916 = vunpack.c.l.b16 %v358
    %v917 = vunpack.c.h.b16 %v358
    %v918 = vunpack.c.l.b16 %v359
    %v919 = vunpack.c.h.b16 %v359
    %v920 = vunpack.c.l.b16 %v360
    %v921 = vunpack.c.h.b16 %v360
    %v922 = vunpack.c.l.b16 %v361
    %v923 = vunpack.c.h.b16 %v361
    %v924 = vunpack.c.l.b16 %v362
    %v925 = vunpack.c.h.b16 %v362
    %v926 = vunpack.c.l.b16 %v363
    %v927 = vunpack.c.h.b16 %v363
    %v928 = vunpack.c.l.b16 %v364
    %v929 = vunpack.c.h.b16 %v364
    %v930 = vunpack.c.l.b16 %v365
    %v931 = vunpack.c.h.b16 %v365
    %v932 = vunpack.c.l.b16 %v366
    %v933 = vunpack.c.h.b16 %v366
    %v934 = vunpack.c.l.b16 %v367
    %v935 = vunpack.c.h.b16 %v367
    %v936 = vunpack.c.l.b16 %v368
    %v937 = vunpack.c.h.b16 %v368
    %v938 = vunpack.c.l.b16 %v369
    %v939 = vunpack.c.h.b16 %v369
    %v940 = vunpack.c.l.b16 %v370
    %v941 = vunpack.c.h.b16 %v370
    %v942 = vunpack.c.l.b16 %v371
    %v943 = vunpack.c.h.b16 %v371
    %v944 = vunpack.c.l.b16 %v372
    %v945 = vunpack.c.h.b16 %v372
    %v946 = vunpack.c.l.b16 %v373
    %v947 = vunpack.c.h.b16 %v373
    %v948 = vunpack.c.l.b16 %v374
    %v949 = vunpack.c.h.b16 %v374
    %v950 = vunpack.c.l.b16 %v375
    %v951 = vunpack.c.h.b16 %v375
    %v952 = vunpack.c.l.b16 %v376
    %v953 = vunpack.c.h.b16 %v376
    %v954 = vunpack.c.l.b16 %v377
    %v955 = vunpack.c.h.b16 %v377
    %v956 = vunpack.c.l.b16 %v378
    %v957 = vunpack.c.h.b16 %v378
    %v958 = vunpack.c.l.b16 %v379
    %v959 = vunpack.c.h.b16 %v379
    %v960 = vunpack.c.l.b16 %v380
    %v961 = vunpack.c.h.b16 %v380
    %v962 = vunpack.c.l.b16 %v381
    %v963 = vunpack.c.h.b16 %v381
    %v964 = vunpack.c.l.b16 %v382
    %v965 = vunpack.c.h.b16 %v382
    %v966 = vunpack.c.l.b16 %v383
    %v967 = vunpack.c.h.b16 %v383
    %v968 = vunpack.c.l.b16 %v384
    %v969 = vunpack.c.h.b16 %v384
    %v970 = vunpack.c.l.b16 %v385
    %v971 = vunpack.c.h.b16 %v385
    %v972 = vunpack.c.l.b16 %v386
    %v973 = vunpack.c.h.b16 %v386
    %v974 = vunpack.c.l.b16 %v387
    %v975 = vunpack.c.h.b16 %v387
    %v976 = vunpack.c.l.b16 %v388
    %v977 = vunpack.c.h.b16 %v388
    %v978 = vunpack.c.l.b16 %v389
    %v979 = vunpack.c.h.b16 %v389
    %v980 = vunpack.c.l.b16 %v390
    %v981 = vunpack.c.h.b16 %v390
    %v982 = vunpack.c.l.b16 %v391
    %v983 = vunpack.c.h.b16 %v391
    %v984 = vunpack.c.l.b16 %v392
    %v985 = vunpack.c.h.b16 %v392
    %v986 = vunpack.c.l.b16 %v393
    %v987 = vunpack.c.h.b16 %v393
    %v988 = vunpack.c.l.b16 %v394
    %v989 = vunpack.c.h.b16 %v394
    %v990 = vunpack.c.l.b16 %v395
    %v991 = vunpack.c.h.b16 %v395
    %v992 = vunpack.c.l.b16 %v396
    %v993 = vunpack.c.h.b16 %v396
    %v994 = vunpack.c.l.b16 %v397
    %v995 = vunpack.c.h.b16 %v397
    %v996 = vunpack.c.l.b16 %v398
    %v997 = vunpack.c.h.b16 %v398
    %v998 = vunpack.c.l.b16 %v399
    %v999 = vunpack.c.h.b16 %v399
    %v1000 = vunpack.c.l.b16 %v400
    %v1001 = vunpack.c.h.b16 %v400
    %v1002 = vunpack.c.l.b16 %v401
    %v1003 = vunpack.c.h.b16 %v401
    %v1004 = vunpack.c.l.b16 %v402
    %v1005 = vunpack.c.h.b16 %v402
    %v1006 = vunpack.c.l.b16 %v403
    %v1007 = vunpack.c.h.b16 %v403
    %v1008 = vunpack.c.l.b16 %v404
    %v1009 = vunpack.c.h.b16 %v404
    %v1010 = vunpack.c.l.b16 %v405
    %v1011 = vunpack.c.h.b16 %v405
    %v1012 = vunpack.c.l.b16 %v406
    %v1013 = vunpack.c.h.b16 %v406
    %v1014 = vunpack.c.l.b16 %v407
    %v1015 = vunpack.c.h.b16 %v407
    %v1016 = vunpack.c.l.b16 %v408
    %v1017 = vunpack.c.h.b16 %v408
    %v1018 = vunpack.c.l.b16 %v409
    %v1019 = vunpack.c.h.b16 %v409
    %v1020 = vunpack.c.l.b16 %v410
    %v1021 = vunpack.c.h.b16 %v410
    %v1022 = vunpack.c.l.b16 %v411
    %v1023 = vunpack.c.h.b16 %v411
    %v1024 = vunpack.c.l.b16 %v412
    %v1025 = vunpack.c.h.b16 %v412
    %v1026 = vunpack.c.l.b16 %v413
    %v1027 = vunpack.c.h.b16 %v413
    %v1028 = vunpack.c.l.b16 %v414
    %v1029 = vunpack.c.h.b16 %v414
    %v1030 = vunpack.c.l.b16 %v415
    %v1031 = vunpack.c.h.b16 %v415
    %v1032 = vunpack.c.l.b16 %v416
    %v1033 = vunpack.c.h.b16 %v416
    %v1034 = vunpack.c.l.b16 %v417
    %v1035 = vunpack.c.h.b16 %v417
    %v1036 = vunpack.c.l.b16 %v418
    %v1037 = vunpack.c.h.b16 %v418
    %v1038 = vunpack.c.l.b16 %v419
    %v1039 = vunpack.c.h.b16 %v419
    %v1040 = vunpack.c.l.b16 %v420
    %v1041 = vunpack.c.h.b16 %v420
    %v1042 = vunpack.c.l.b16 %v421
    %v1043 = vunpack.c.h.b16 %v421
    %v1044 = vunpack.c.l.b16 %v422
    %v1045 = vunpack.c.h.b16 %v422
    %v1046 = vunpack.c.l.b16 %v423
    %v1047 = vunpack.c.h.b16 %v423
    %v1048 = vunpack.c.l.b16 %v424
    %v1049 = vunpack.c.h.b16 %v424
    %v1050 = vunpack.c.l.b16 %v425
    %v1051 = vunpack.c.h.b16 %v425
    %v1052 = vunpack.c.l.b16 %v426
    %v1053 = vunpack.c.h.b16 %v426
    %v1054 = vunpack.c.l.b16 %v427
    %v1055 = vunpack.c.h.b16 %v427
    %v1056 = vunpack.c.l.b16 %v428
    %v1057 = vunpack.c.h.b16 %v428
    %v1058 = vunpack.c.l.b16 %v429
    %v1059 = vunpack.c.h.b16 %v429
    %v1060 = vunpack.c.l.b16 %v430
    %v1061 = vunpack.c.h.b16 %v430
    %v1062 = vunpack.c.l.b16 %v431
    %v1063 = vunpack.c.h.b16 %v431
    %v1064 = vunpack.c.l.b16 %v432
    %v1065 = vunpack.c.h.b16 %v432
    %v1066 = vunpack.c.l.b16 %v433
    %v1067 = vunpack.c.h.b16 %v433
    %v1068 = vunpack.c.l.b16 %v434
    %v1069 = vunpack.c.h.b16 %v434
    %v1070 = vunpack.c.l.b16 %v435
    %v1071 = vunpack.c.h.b16 %v435
    %v1072 = vunpack.c.l.b16 %v436
    %v1073 = vunpack.c.h.b16 %v436
    %v1074 = vunpack.c.l.b16 %v437
    %v1075 = vunpack.c.h.b16 %v437
    %v1076 = vunpack.c.l.b16 %v438
    %v1077 = vunpack.c.h.b16 %v438
    %v1078 = vunpack.c.l.b16 %v439
    %v1079 = vunpack.c.h.b16 %v439
    %v1080 = vunpack.c.l.b16 %v440
    %v1081 = vunpack.c.h.b16 %v440
    %v1082 = vunpack.c.l.b16 %v441
    %v1083 = vunpack.c.h.b16 %v441
    %v1084 = vunpack.c.l.b16 %v442
    %v1085 = vunpack.c.h.b16 %v442
    %v1086 = vunpack.c.l.b16 %v443
    %v1087 = vunpack.c.h.b16 %v443
    %v1088 = vunpack.c.l.b16 %v444
    %v1089 = vunpack.c.h.b16 %v444
    %v1090 = vunpack.c.l.b16 %v445
    %v1091 = vunpack.c.h.b16 %v445
    %v1092 = vunpack.c.l.b16 %v446
    %v1093 = vunpack.c.h.b16 %v446
    %v1094 = vunpack.c.l.b16 %v447
    %v1095 = vunpack.c.h.b16 %v447
    %v1096 = vpack.c.b16 %v668, %v664
    %v1097 = vpack.c.b16 %v669, %v665
    %v1098 = vpack.c.b16 %v670, %v666
    %v1099 = vpack.c.b16 %v671, %v667
    %v1100 = vpack.c.b16 %v676, %v672
    %v1101 = vpack.c.b16 %v677, %v673
    %v1102 = vpack.c.b16 %v678, %v674
    %v1103 = vpack.c.b16 %v679, %v675
    %v1104 = vpack.c.b16 %v684, %v680
    %v1105 = vpack.c.b16 %v685, %v681
    %v1106 = vpack.c.b16 %v686, %v682
    %v1107 = vpack.c.b16 %v687, %v683
    %v1108 = vpack.c.b16 %v692, %v688
    %v1109 = vpack.c.b16 %v693, %v689
    %v1110 = vpack.c.b16 %v694, %v690
    %v1111 = vpack.c.b16 %v695, %v691
    %v1112 = vpack.c.b16 %v700, %v696
    %v1113 = vpack.c.b16 %v701, %v697
    %v1114 = vpack.c.b16 %v702, %v698
    %v1115 = vpack.c.b16 %v703, %v699
    %v1116 = vpack.c.b16 %v708, %v704
    %v1117 = vpack.c.b16 %v709, %v705
    %v1118 = vpack.c.b16 %v710, %v706
    %v1119 = vpack.c.b16 %v711, %v707
    %v1120 = vpack.c.b16 %v716, %v712
    %v1121 = vpack.c.b16 %v717, %v713
    %v1122 = vpack.c.b16 %v718, %v714
    %v1123 = vpack.c.b16 %v719, %v715
    %v1124 = vpack.c.b16 %v724, %v720
    %v1125 = vpack.c.b16 %v725, %v721
    %v1126 = vpack.c.b16 %v726, %v722
    %v1127 = vpack.c.b16 %v727, %v723
    %v1128 = vpack.c.b16 %v732, %v728
    %v1129 = vpack.c.b16 %v733, %v729
    %v1130 = vpack.c.b16 %v734, %v730
    %v1131 = vpack.c.b16 %v735, %v731
    %v1132 = vpack.c.b16 %v740, %v736
    %v1133 = vpack.c.b16 %v741, %v737
    %v1134 = vpack.c.b16 %v742, %v738
    %v1135 = vpack.c.b16 %v743, %v739
    %v1136 = vpack.c.b16 %v748, %v744
    %v1137 = vpack.c.b16 %v749, %v745
    %v1138 = vpack.c.b16 %v750, %v746
    %v1139 = vpack.c.b16 %v751, %v747
    %v1140 = vpack.c.b16 %v756, %v752
    %v1141 = vpack.c.b16 %v757, %v753
    %v1142 = vpack.c.b16 %v758, %v754
    %v1143 = vpack.c.b16 %v759, %v755
    %v1144 = vpack.c.b16 %v764, %v760
    %v1145 = vpack.c.b16 %v765, %v761
    %v1146 = vpack.c.b16 %v766, %v762
    %v1147 = vpack.c.b16 %v767, %v763
    %v1148 = vpack.c.b16 %v772, %v768
    %v1149 = vpack.c.b16 %v773, %v769
    %v1150 = vpack.c.b16 %v774, %v770
    %v1151 = vpack.c.b16 %v775, %v771
    %v1152 = vpack.c.b16 %v780, %v776
    %v1153 = vpack.c.b16 %v781, %v777
    %v1154 = vpack.c.b16 %v782, %v778
    %v1155 = vpack.c.b16 %v783, %v779
    %v1156 = vpack.c.b16 %v788, %v784
    %v1157 = vpack.c.b16 %v789, %v785
    %v1158 = vpack.c.b16 %v790, %v786
    %v1159 = vpack.c.b16 %v791, %v787
    %v1160 = vpack.c.b16 %v796, %v792
    %v1161 = vpack.c.b16 %v797, %v793
    %v1162 = vpack.c.b16 %v798, %v794
    %v1163 = vpack.c.b16 %v799, %v795
    %v1164 = vpack.c.b16 %v804, %v800
    %v1165 = vpack.c.b16 %v805, %v801
    %v1166 = vpack.c.b16 %v806, %v802
    %v1167 = vpack.c.b16 %v807, %v803
    %v1168 = vpack.c.b16 %v812, %v808
    %v1169 = vpack.c.b16 %v813, %v809
    %v1170 = vpack.c.b16 %v814, %v810
    %v1171 = vpack.c.b16 %v815, %v811
    %v1172 = vpack.c.b16 %v820, %v816
    %v1173 = vpack.c.b16 %v821, %v817
    %v1174 = vpack.c.b16 %v822, %v818
    %v1175 = vpack.c.b16 %v823, %v819
    %v1176 = vpack.c.b16 %v828, %v824
    %v1177 = vpack.c.b16 %v829, %v825
    %v1178 = vpack.c.b16 %v830, %v826
    %v1179 = vpack.c.b16 %v831, %v827
    %v1180 = vpack.c.b16 %v836, %v832
    %v1181 = vpack.c.b16 %v837, %v833
    %v1182 = vpack.c.b16 %v838, %v834
    %v1183 = vpack.c.b16 %v839, %v835
    %v1184 = vpack.c.b16 %v844, %v840
    %v1185 = vpack.c.b16 %v845, %v841
    %v1186 = vpack.c.b16 %v846, %v842
    %v1187 = vpack.c.b16 %v847, %v843
    %v1188 = vpack.c.b16 %v852, %v848
    %v1189 = vpack.c.b16 %v853, %v849
    %v1190 = vpack.c.b16 %v854, %v850
    %v1191 = vpack.c.b16 %v855, %v851
    %v1192 = vpack.c.b16 %v860, %v856
    %v1193 = vpack.c.b16 %v861, %v857
    %v1194 = vpack.c.b16 %v862, %v858
    %v1195 = vpack.c.b16 %v863, %v859
    %v1196 = vpack.c.b16 %v868, %v864
    %v1197 = vpack.c.b16 %v869, %v865
    %v1198 = vpack.c.b16 %v870, %v866
    %v1199 = vpack.c.b16 %v871, %v867
    %v1200 = vpack.c.b16 %v876, %v872
    %v1201 = vpack.c.b16 %v877, %v873
    %v1202 = vpack.c.b16 %v878, %v874
    %v1203 = vpack.c.b16 %v879, %v875
    %v1204 = vpack.c.b16 %v884, %v880
    %v1205 = vpack.c.b16 %v885, %v881
    %v1206 = vpack.c.b16 %v886, %v882
    %v1207 = vpack.c.b16 %v887, %v883
    %v1208 = vpack.c.b16 %v892, %v888
    %v1209 = vpack.c.b16 %v893, %v889
    %v1210 = vpack.c.b16 %v894, %v890
    %v1211 = vpack.c.b16 %v895, %v891
    %v1212 = vpack.c.b16 %v900, %v896
    %v1213 = vpack.c.b16 %v901, %v897
    %v1214 = vpack.c.b16 %v902, %v898
    %v1215 = vpack.c.b16 %v903, %v899
    %v1216 = vpack.c.b16 %v908, %v904
    %v1217 = vpack.c.b16 %v909, %v905
    %v1218 = vpack.c.b16 %v910, %v906
    %v1219 = vpack.c.b16 %v911, %v907
    %v1220 = vpack.c.b16 %v916, %v912
    %v1221 = vpack.c.b16 %v917, %v913
    %v1222 = vpack.c.b16 %v918, %v914
    %v1223 = vpack.c.b16 %v919, %v915
    %v1224 = vpack.c.b16 %v924, %v920
    %v1225 = vpack.c.b16 %v925, %v921
    %v1226 = vpack.c.b16 %v926, %v922
    %v1227 = vpack.c.b16 %v927, %v923
    %v1228 = vpack.c.b16 %v932, %v928
    %v1229 = vpack.c.b16 %v933, %v929
    %v1230 = vpack.c.b16 %v934, %v930
    %v1231 = vpack.c.b16 %v935, %v931
    %v1232 = vpack.c.b16 %v940, %v936
    %v1233 = vpack.c.b16 %v941, %v937
    %v1234 = vpack.c.b16 %v942, %v938
    %v1235 = vpack.c.b16 %v943, %v939
    %v1236 = vpack.c.b16 %v948, %v944
    %v1237 = vpack.c.b16 %v949, %v945
    %v1238 = vpack.c.b16 %v950, %v946
    %v1239 = vpack.c.b16 %v951, %v947
    %v1240 = vpack.c.b16 %v956, %v952
    %v1241 = vpack.c.b16 %v957, %v953
    %v1242 = vpack.c.b16 %v958, %v954
    %v1243 = vpack.c.b16 %v959, %v955
    %v1244 = vpack.c.b16 %v964, %v960
    %v1245 = vpack.c.b16 %v965, %v961
    %v1246 = vpack.c.b16 %v966, %v962
    %v1247 = vpack.c.b16 %v967, %v963
    %v1248 = vpack.c.b16 %v972, %v968
    %v1249 = vpack.c.b16 %v973, %v969
    %v1250 = vpack.c.b16 %v974, %v970
    %v1251 = vpack.c.b16 %v975, %v971
    %v1252 = vpack.c.b16 %v980, %v976
    %v1253 = vpack.c.b16 %v981, %v977
    %v1254 = vpack.c.b16 %v982, %v978
    %v1255 = vpack.c.b16 %v983, %v979
    %v1256 = vpack.c.b16 %v988, %v984
    %v1257 = vpack.c.b16 %v989, %v985
    %v1258 = vpack.c.b16 %v990, %v986
    %v1259 = vpack.c.b16 %v991, %v987
    %v1260 = vpack.c.b16 %v996, %v992
    %v1261 = vpack.c.b16 %v997, %v993
    %v1262 = vpack.c.b16 %v998, %v994
    %v1263 = vpack.c.b16 %v999, %v995
    %v1264 = vpack.c.b16 %v1004, %v1000
    %v1265 = vpack.c.b16 %v1005, %v1001
    %v1266 = vpack.c.b16 %v1006, %v1002
    %v1267 = vpack.c.b16 %v1007, %v1003
    %v1268 = vpack.c.b16 %v1012, %v1008
    %v1269 = vpack.c.b16 %v1013, %v1009
    %v1270 = vpack.c.b16 %v1014, %v1010
    %v1271 = vpack.c.b16 %v1015, %v1011
    %v1272 = vpack.c.b16 %v1020, %v1016
    %v1273 = vpack.c.b16 %v1021, %v1017
    %v1274 = vpack.c.b16 %v1022, %v1018
    %v1275 = vpack.c.b16 %v1023, %v1019
    %v1276 = vpack.c.b16 %v1028, %v1024
    %v1277 = vpack.c.b16 %v1029, %v1025
    %v1278 = vpack.c.b16 %v1030, %v1026
    %v1279 = vpack.c.b16 %v1031, %v1027
    %v1280 = vpack.c.b16 %v1036, %v1032
    %v1281 = vpack.c.b16 %v1037, %v1033
    %v1282 = vpack.c.b16 %v1038, %v1034
    %v1283 = vpack.c.b16 %v1039, %v1035
    %v1284 = vpack.c.b16 %v1044, %v1040
    %v1285 = vpack.c.b16 %v1045, %v1041
    %v1286 = vpack.c.b16 %v1046, %v1042
    %v1287 = vpack.c.b16 %v1047, %v1043
    %v1288 = vpack.c.b16 %v1052, %v1048
    %v1289 = vpack.c.b16 %v1053, %v1049
    %v1290 = vpack.c.b16 %v1054, %v1050
    %v1291 = vpack.c.b16 %v1055, %v1051
    %v1292 = vpack.c.b16 %v1060, %v1056
    %v1293 = vpack.c.b16 %v1061, %v1057
    %v1294 = vpack.c.b16 %v1062, %v1058
    %v1295 = vpack.c.b16 %v1063, %v1059
    %v1296 = vpack.c.b16 %v1068, %v1064
    %v1297 = vpack.c.b16 %v1069, %v1065
    %v1298 = vpack.c.b16 %v1070, %v1066
    %v1299 = vpack.c.b16 %v1071, %v1067
    %v1300 = vpack.c.b16 %v1076, %v1072
    %v1301 = vpack.c.b16 %v1077, %v1073
    %v1302 = vpack.c.b16 %v1078, %v1074
    %v1303 = vpack.c.b16 %v1079, %v1075
    %v1304 = vpack.c.b16 %v1084, %v1080
    %v1305 = vpack.c.b16 %v1085, %v1081
    %v1306 = vpack.c.b16 %v1086, %v1082
    %v1307 = vpack.c.b16 %v1087, %v1083
    %v1308 = vpack.c.b16 %v1092, %v1088
    %v1309 = vpack.c.b16 %v1093, %v1089
    %v1310 = vpack.c.b16 %v1094, %v1090
    %v1311 = vpack.c.b16 %v1095, %v1091
    %vm1528 = vcmask 785408
    %v1530 = vsel %vm1528, %v123, 0
    %1532 = vmatpush.bf16.msra.mxu0 %v1124
    %1533 = vmatpush.bf16.msra.mxu0 %v1120
    %1534 = vmatpush.bf16.msra.mxu0 %v1116
    %1535 = vmatpush.bf16.msra.mxu0 %v1112
    %1536 = vmatpush.bf16.msra.mxu0 %v1108
    %1537 = vmatpush.bf16.msra.mxu0 %v1104
    %1538 = vmatpush.bf16.msra.mxu0 %v1100
    %1539 = vmatpush.bf16.msra.mxu0 %v1096
    %1540 = vmatmul.bf16.gmra.mxu0 %v117
    %v1541 = vpop.f32.mrf.mxu0
    %v1542 = vadd.f32 0.0, %v1541
    %v1543 = vpop.f32.mrf.mxu0
    %v1544 = vadd.f32 0.0, %v1543
    %1545 = vdwg.mxu0
    %1546 = vmatpush.bf16.msra.mxu0 %v1156
    %1547 = vmatpush.bf16.msra.mxu0 %v1152
    %1548 = vmatpush.bf16.msra.mxu0 %v1148
    %1549 = vmatpush.bf16.msra.mxu0 %v1144
    %1550 = vmatpush.bf16.msra.mxu0 %v1140
    %1551 = vmatpush.bf16.msra.mxu0 %v1136
    %1552 = vmatpush.bf16.msra.mxu0 %v1132
    %1553 = vmatpush.bf16.msra.mxu0 %v1128
    %1554 = vmatmul.bf16.gmra.mxu0 %v118
    %v1555 = vpop.f32.mrf.mxu0
    %v1556 = vadd.f32 %v1542, %v1555
    %v1557 = vpop.f32.mrf.mxu0
    %v1558 = vadd.f32 %v1544, %v1557
    %1559 = vdwg.mxu0
    %1560 = vmatpush.bf16.msra.mxu0 %v1188
    %1561 = vmatpush.bf16.msra.mxu0 %v1184
    %1562 = vmatpush.bf16.msra.mxu0 %v1180
    %1563 = vmatpush.bf16.msra.mxu0 %v1176
    %1564 = vmatpush.bf16.msra.mxu0 %v1172
    %1565 = vmatpush.bf16.msra.mxu0 %v1168
    %1566 = vmatpush.bf16.msra.mxu0 %v1164
    %1567 = vmatpush.bf16.msra.mxu0 %v1160
    %1568 = vmatmul.bf16.gmra.mxu0 %v119
    %v1569 = vpop.f32.mrf.mxu0
    %v1570 = vadd.f32 %v1556, %v1569
    %v1571 = vpop.f32.mrf.mxu0
    %v1572 = vadd.f32 %v1558, %v1571
    %1573 = vdwg.mxu0
    %1574 = vmatpush.bf16.msra.mxu0 %v1220
    %1575 = vmatpush.bf16.msra.mxu0 %v1216
    %1576 = vmatpush.bf16.msra.mxu0 %v1212
    %1577 = vmatpush.bf16.msra.mxu0 %v1208
    %1578 = vmatpush.bf16.msra.mxu0 %v1204
    %1579 = vmatpush.bf16.msra.mxu0 %v1200
    %1580 = vmatpush.bf16.msra.mxu0 %v1196
    %1581 = vmatpush.bf16.msra.mxu0 %v1192
    %1582 = vmatmul.bf16.gmra.mxu0 %v120
    %v1583 = vpop.f32.mrf.mxu0
    %v1584 = vadd.f32 %v1570, %v1583
    %v1585 = vpop.f32.mrf.mxu0
    %v1586 = vadd.f32 %v1572, %v1585
    %1587 = vdwg.mxu0
    %1588 = vmatpush.bf16.msra.mxu0 %v1252
    %1589 = vmatpush.bf16.msra.mxu0 %v1248
    %1590 = vmatpush.bf16.msra.mxu0 %v1244
    %1591 = vmatpush.bf16.msra.mxu0 %v1240
    %1592 = vmatpush.bf16.msra.mxu0 %v1236
    %1593 = vmatpush.bf16.msra.mxu0 %v1232
    %1594 = vmatpush.bf16.msra.mxu0 %v1228
    %1595 = vmatpush.bf16.msra.mxu0 %v1224
    %1596 = vmatmul.bf16.gmra.mxu0 %v121
    %v1597 = vpop.f32.mrf.mxu0
    %v1598 = vadd.f32 %v1584, %v1597
    %v1599 = vpop.f32.mrf.mxu0
    %v1600 = vadd.f32 %v1586, %v1599
    %1601 = vdwg.mxu0
    %1602 = vmatpush.bf16.msra.mxu0 %v1284
    %1603 = vmatpush.bf16.msra.mxu0 %v1280
    %1604 = vmatpush.bf16.msra.mxu0 %v1276
    %1605 = vmatpush.bf16.msra.mxu0 %v1272
    %1606 = vmatpush.bf16.msra.mxu0 %v1268
    %1607 = vmatpush.bf16.msra.mxu0 %v1264
    %1608 = vmatpush.bf16.msra.mxu0 %v1260
    %1609 = vmatpush.bf16.msra.mxu0 %v1256
    %1610 = vmatmul.bf16.gmra.mxu0 %v122
    %v1611 = vpop.f32.mrf.mxu0
    %v1612 = vadd.f32 %v1598, %v1611
    %v1613 = vpop.f32.mrf.mxu0
    %v1614 = vadd.f32 %v1600, %v1613
    %1615 = vdwg.mxu0
    %1616 = vmatpush.bf16.msra.mxu0 0
    %1617 = vmatpush.bf16.msra.mxu0 0
    %1618 = vmatpush.bf16.msra.mxu0 %v1308
    %1619 = vmatpush.bf16.msra.mxu0 %v1304
    %1620 = vmatpush.bf16.msra.mxu0 %v1300
    %1621 = vmatpush.bf16.msra.mxu0 %v1296
    %1622 = vmatpush.bf16.msra.mxu0 %v1292
    %1623 = vmatpush.bf16.msra.mxu0 %v1288
    %1624 = vmatmul.bf16.gmra.mxu0 %v1530
    %v1625 = vpop.f32.mrf.mxu0
    %v1626 = vadd.f32 %v1612, %v1625
    %v1627 = vpop.f32.mrf.mxu0
    %v1628 = vadd.f32 %v1614, %v1627
    %1629 = vdwg.mxu0
    %1630 = vmatpush.bf16.msra.mxu0 %v1125
    %1631 = vmatpush.bf16.msra.mxu0 %v1121
    %1632 = vmatpush.bf16.msra.mxu0 %v1117
    %1633 = vmatpush.bf16.msra.mxu0 %v1113
    %1634 = vmatpush.bf16.msra.mxu0 %v1109
    %1635 = vmatpush.bf16.msra.mxu0 %v1105
    %1636 = vmatpush.bf16.msra.mxu0 %v1101
    %1637 = vmatpush.bf16.msra.mxu0 %v1097
    %1638 = vmatmul.bf16.gmra.mxu0 %v117
    %v1639 = vpop.f32.mrf.mxu0
    %v1640 = vadd.f32 0.0, %v1639
    %v1641 = vpop.f32.mrf.mxu0
    %v1642 = vadd.f32 0.0, %v1641
    %1643 = vdwg.mxu0
    %1644 = vmatpush.bf16.msra.mxu0 %v1157
    %1645 = vmatpush.bf16.msra.mxu0 %v1153
    %1646 = vmatpush.bf16.msra.mxu0 %v1149
    %1647 = vmatpush.bf16.msra.mxu0 %v1145
    %1648 = vmatpush.bf16.msra.mxu0 %v1141
    %1649 = vmatpush.bf16.msra.mxu0 %v1137
    %1650 = vmatpush.bf16.msra.mxu0 %v1133
    %1651 = vmatpush.bf16.msra.mxu0 %v1129
    %1652 = vmatmul.bf16.gmra.mxu0 %v118
    %v1653 = vpop.f32.mrf.mxu0
    %v1654 = vadd.f32 %v1640, %v1653
    %v1655 = vpop.f32.mrf.mxu0
    %v1656 = vadd.f32 %v1642, %v1655
    %1657 = vdwg.mxu0
    %1658 = vmatpush.bf16.msra.mxu0 %v1189
    %1659 = vmatpush.bf16.msra.mxu0 %v1185
    %1660 = vmatpush.bf16.msra.mxu0 %v1181
    %1661 = vmatpush.bf16.msra.mxu0 %v1177
    %1662 = vmatpush.bf16.msra.mxu0 %v1173
    %1663 = vmatpush.bf16.msra.mxu0 %v1169
    %1664 = vmatpush.bf16.msra.mxu0 %v1165
    %1665 = vmatpush.bf16.msra.mxu0 %v1161
    %1666 = vmatmul.bf16.gmra.mxu0 %v119
    %v1667 = vpop.f32.mrf.mxu0
    %v1668 = vadd.f32 %v1654, %v1667
    %v1669 = vpop.f32.mrf.mxu0
    %v1670 = vadd.f32 %v1656, %v1669
    %1671 = vdwg.mxu0
    %1672 = vmatpush.bf16.msra.mxu0 %v1221
    %1673 = vmatpush.bf16.msra.mxu0 %v1217
    %1674 = vmatpush.bf16.msra.mxu0 %v1213
    %1675 = vmatpush.bf16.msra.mxu0 %v1209
    %1676 = vmatpush.bf16.msra.mxu0 %v1205
    %1677 = vmatpush.bf16.msra.mxu0 %v1201
    %1678 = vmatpush.bf16.msra.mxu0 %v1197
    %1679 = vmatpush.bf16.msra.mxu0 %v1193
    %1680 = vmatmul.bf16.gmra.mxu0 %v120
    %v1681 = vpop.f32.mrf.mxu0
    %v1682 = vadd.f32 %v1668, %v1681
    %v1683 = vpop.f32.mrf.mxu0
    %v1684 = vadd.f32 %v1670, %v1683
    %1685 = vdwg.mxu0
    %1686 = vmatpush.bf16.msra.mxu0 %v1253
    %1687 = vmatpush.bf16.msra.mxu0 %v1249
    %1688 = vmatpush.bf16.msra.mxu0 %v1245
    %1689 = vmatpush.bf16.msra.mxu0 %v1241
    %1690 = vmatpush.bf16.msra.mxu0 %v1237
    %1691 = vmatpush.bf16.msra.mxu0 %v1233
    %1692 = vmatpush.bf16.msra.mxu0 %v1229
    %1693 = vmatpush.bf16.msra.mxu0 %v1225
    %1694 = vmatmul.bf16.gmra.mxu0 %v121
    %v1695 = vpop.f32.mrf.mxu0
    %v1696 = vadd.f32 %v1682, %v1695
    %v1697 = vpop.f32.mrf.mxu0
    %v1698 = vadd.f32 %v1684, %v1697
    %1699 = vdwg.mxu0
    %1700 = vmatpush.bf16.msra.mxu0 %v1285
    %1701 = vmatpush.bf16.msra.mxu0 %v1281
    %1702 = vmatpush.bf16.msra.mxu0 %v1277
    %1703 = vmatpush.bf16.msra.mxu0 %v1273
    %1704 = vmatpush.bf16.msra.mxu0 %v1269
    %1705 = vmatpush.bf16.msra.mxu0 %v1265
    %1706 = vmatpush.bf16.msra.mxu0 %v1261
    %1707 = vmatpush.bf16.msra.mxu0 %v1257
    %1708 = vmatmul.bf16.gmra.mxu0 %v122
    %v1709 = vpop.f32.mrf.mxu0
    %v1710 = vadd.f32 %v1696, %v1709
    %v1711 = vpop.f32.mrf.mxu0
    %v1712 = vadd.f32 %v1698, %v1711
    %1713 = vdwg.mxu0
    %1714 = vmatpush.bf16.msra.mxu0 0
    %1715 = vmatpush.bf16.msra.mxu0 0
    %1716 = vmatpush.bf16.msra.mxu0 %v1309
    %1717 = vmatpush.bf16.msra.mxu0 %v1305
    %1718 = vmatpush.bf16.msra.mxu0 %v1301
    %1719 = vmatpush.bf16.msra.mxu0 %v1297
    %1720 = vmatpush.bf16.msra.mxu0 %v1293
    %1721 = vmatpush.bf16.msra.mxu0 %v1289
    %1722 = vmatmul.bf16.gmra.mxu0 %v1530
    %v1723 = vpop.f32.mrf.mxu0
    %v1724 = vadd.f32 %v1710, %v1723
    %v1725 = vpop.f32.mrf.mxu0
    %v1726 = vadd.f32 %v1712, %v1725
    %1727 = vdwg.mxu0
    %1728 = vmatpush.bf16.msra.mxu0 %v1126
    %1729 = vmatpush.bf16.msra.mxu0 %v1122
    %1730 = vmatpush.bf16.msra.mxu0 %v1118
    %1731 = vmatpush.bf16.msra.mxu0 %v1114
    %1732 = vmatpush.bf16.msra.mxu0 %v1110
    %1733 = vmatpush.bf16.msra.mxu0 %v1106
    %1734 = vmatpush.bf16.msra.mxu0 %v1102
    %1735 = vmatpush.bf16.msra.mxu0 %v1098
    %1736 = vmatmul.bf16.gmra.mxu0 %v117
    %v1737 = vpop.f32.mrf.mxu0
    %v1738 = vadd.f32 0.0, %v1737
    %v1739 = vpop.f32.mrf.mxu0
    %v1740 = vadd.f32 0.0, %v1739
    %1741 = vdwg.mxu0
    %1742 = vmatpush.bf16.msra.mxu0 %v1158
    %1743 = vmatpush.bf16.msra.mxu0 %v1154
    %1744 = vmatpush.bf16.msra.mxu0 %v1150
    %1745 = vmatpush.bf16.msra.mxu0 %v1146
    %1746 = vmatpush.bf16.msra.mxu0 %v1142
    %1747 = vmatpush.bf16.msra.mxu0 %v1138
    %1748 = vmatpush.bf16.msra.mxu0 %v1134
    %1749 = vmatpush.bf16.msra.mxu0 %v1130
    %1750 = vmatmul.bf16.gmra.mxu0 %v118
    %v1751 = vpop.f32.mrf.mxu0
    %v1752 = vadd.f32 %v1738, %v1751
    %v1753 = vpop.f32.mrf.mxu0
    %v1754 = vadd.f32 %v1740, %v1753
    %1755 = vdwg.mxu0
    %1756 = vmatpush.bf16.msra.mxu0 %v1190
    %1757 = vmatpush.bf16.msra.mxu0 %v1186
    %1758 = vmatpush.bf16.msra.mxu0 %v1182
    %1759 = vmatpush.bf16.msra.mxu0 %v1178
    %1760 = vmatpush.bf16.msra.mxu0 %v1174
    %1761 = vmatpush.bf16.msra.mxu0 %v1170
    %1762 = vmatpush.bf16.msra.mxu0 %v1166
    %1763 = vmatpush.bf16.msra.mxu0 %v1162
    %1764 = vmatmul.bf16.gmra.mxu0 %v119
    %v1765 = vpop.f32.mrf.mxu0
    %v1766 = vadd.f32 %v1752, %v1765
    %v1767 = vpop.f32.mrf.mxu0
    %v1768 = vadd.f32 %v1754, %v1767
    %1769 = vdwg.mxu0
    %1770 = vmatpush.bf16.msra.mxu0 %v1222
    %1771 = vmatpush.bf16.msra.mxu0 %v1218
    %1772 = vmatpush.bf16.msra.mxu0 %v1214
    %1773 = vmatpush.bf16.msra.mxu0 %v1210
    %1774 = vmatpush.bf16.msra.mxu0 %v1206
    %1775 = vmatpush.bf16.msra.mxu0 %v1202
    %1776 = vmatpush.bf16.msra.mxu0 %v1198
    %1777 = vmatpush.bf16.msra.mxu0 %v1194
    %1778 = vmatmul.bf16.gmra.mxu0 %v120
    %v1779 = vpop.f32.mrf.mxu0
    %v1780 = vadd.f32 %v1766, %v1779
    %v1781 = vpop.f32.mrf.mxu0
    %v1782 = vadd.f32 %v1768, %v1781
    %1783 = vdwg.mxu0
    %1784 = vmatpush.bf16.msra.mxu0 %v1254
    %1785 = vmatpush.bf16.msra.mxu0 %v1250
    %1786 = vmatpush.bf16.msra.mxu0 %v1246
    %1787 = vmatpush.bf16.msra.mxu0 %v1242
    %1788 = vmatpush.bf16.msra.mxu0 %v1238
    %1789 = vmatpush.bf16.msra.mxu0 %v1234
    %1790 = vmatpush.bf16.msra.mxu0 %v1230
    %1791 = vmatpush.bf16.msra.mxu0 %v1226
    %1792 = vmatmul.bf16.gmra.mxu0 %v121
    %v1793 = vpop.f32.mrf.mxu0
    %v1794 = vadd.f32 %v1780, %v1793
    %v1795 = vpop.f32.mrf.mxu0
    %v1796 = vadd.f32 %v1782, %v1795
    %1797 = vdwg.mxu0
    %1798 = vmatpush.bf16.msra.mxu0 %v1286
    %1799 = vmatpush.bf16.msra.mxu0 %v1282
    %1800 = vmatpush.bf16.msra.mxu0 %v1278
    %1801 = vmatpush.bf16.msra.mxu0 %v1274
    %1802 = vmatpush.bf16.msra.mxu0 %v1270
    %1803 = vmatpush.bf16.msra.mxu0 %v1266
    %1804 = vmatpush.bf16.msra.mxu0 %v1262
    %1805 = vmatpush.bf16.msra.mxu0 %v1258
    %1806 = vmatmul.bf16.gmra.mxu0 %v122
    %v1807 = vpop.f32.mrf.mxu0
    %v1808 = vadd.f32 %v1794, %v1807
    %v1809 = vpop.f32.mrf.mxu0
    %v1810 = vadd.f32 %v1796, %v1809
    %1811 = vdwg.mxu0
    %1812 = vmatpush.bf16.msra.mxu0 0
    %1813 = vmatpush.bf16.msra.mxu0 0
    %1814 = vmatpush.bf16.msra.mxu0 %v1310
    %1815 = vmatpush.bf16.msra.mxu0 %v1306
    %1816 = vmatpush.bf16.msra.mxu0 %v1302
    %1817 = vmatpush.bf16.msra.mxu0 %v1298
    %1818 = vmatpush.bf16.msra.mxu0 %v1294
    %1819 = vmatpush.bf16.msra.mxu0 %v1290
    %1820 = vmatmul.bf16.gmra.mxu0 %v1530
    %v1821 = vpop.f32.mrf.mxu0
    %v1822 = vadd.f32 %v1808, %v1821
    %v1823 = vpop.f32.mrf.mxu0
    %v1824 = vadd.f32 %v1810, %v1823
    %1825 = vdwg.mxu0
    %1826 = vmatpush.bf16.msra.mxu0 %v1127
    %1827 = vmatpush.bf16.msra.mxu0 %v1123
    %1828 = vmatpush.bf16.msra.mxu0 %v1119
    %1829 = vmatpush.bf16.msra.mxu0 %v1115
    %1830 = vmatpush.bf16.msra.mxu0 %v1111
    %1831 = vmatpush.bf16.msra.mxu0 %v1107
    %1832 = vmatpush.bf16.msra.mxu0 %v1103
    %1833 = vmatpush.bf16.msra.mxu0 %v1099
    %1834 = vmatmul.bf16.gmra.mxu0 %v117
    %v1835 = vpop.f32.mrf.mxu0
    %v1836 = vadd.f32 0.0, %v1835
    %v1837 = vpop.f32.mrf.mxu0
    %v1838 = vadd.f32 0.0, %v1837
    %1839 = vdwg.mxu0
    %1840 = vmatpush.bf16.msra.mxu0 %v1159
    %1841 = vmatpush.bf16.msra.mxu0 %v1155
    %1842 = vmatpush.bf16.msra.mxu0 %v1151
    %1843 = vmatpush.bf16.msra.mxu0 %v1147
    %1844 = vmatpush.bf16.msra.mxu0 %v1143
    %1845 = vmatpush.bf16.msra.mxu0 %v1139
    %1846 = vmatpush.bf16.msra.mxu0 %v1135
    %1847 = vmatpush.bf16.msra.mxu0 %v1131
    %1848 = vmatmul.bf16.gmra.mxu0 %v118
    %v1849 = vpop.f32.mrf.mxu0
    %v1850 = vadd.f32 %v1836, %v1849
    %v1851 = vpop.f32.mrf.mxu0
    %v1852 = vadd.f32 %v1838, %v1851
    %1853 = vdwg.mxu0
    %1854 = vmatpush.bf16.msra.mxu0 %v1191
    %1855 = vmatpush.bf16.msra.mxu0 %v1187
    %1856 = vmatpush.bf16.msra.mxu0 %v1183
    %1857 = vmatpush.bf16.msra.mxu0 %v1179
    %1858 = vmatpush.bf16.msra.mxu0 %v1175
    %1859 = vmatpush.bf16.msra.mxu0 %v1171
    %1860 = vmatpush.bf16.msra.mxu0 %v1167
    %1861 = vmatpush.bf16.msra.mxu0 %v1163
    %1862 = vmatmul.bf16.gmra.mxu0 %v119
    %v1863 = vpop.f32.mrf.mxu0
    %v1864 = vadd.f32 %v1850, %v1863
    %v1865 = vpop.f32.mrf.mxu0
    %v1866 = vadd.f32 %v1852, %v1865
    %1867 = vdwg.mxu0
    %1868 = vmatpush.bf16.msra.mxu0 %v1223
    %1869 = vmatpush.bf16.msra.mxu0 %v1219
    %1870 = vmatpush.bf16.msra.mxu0 %v1215
    %1871 = vmatpush.bf16.msra.mxu0 %v1211
    %1872 = vmatpush.bf16.msra.mxu0 %v1207
    %1873 = vmatpush.bf16.msra.mxu0 %v1203
    %1874 = vmatpush.bf16.msra.mxu0 %v1199
    %1875 = vmatpush.bf16.msra.mxu0 %v1195
    %1876 = vmatmul.bf16.gmra.mxu0 %v120
    %v1877 = vpop.f32.mrf.mxu0
    %v1878 = vadd.f32 %v1864, %v1877
    %v1879 = vpop.f32.mrf.mxu0
    %v1880 = vadd.f32 %v1866, %v1879
    %1881 = vdwg.mxu0
    %1882 = vmatpush.bf16.msra.mxu0 %v1255
    %1883 = vmatpush.bf16.msra.mxu0 %v1251
    %1884 = vmatpush.bf16.msra.mxu0 %v1247
    %1885 = vmatpush.bf16.msra.mxu0 %v1243
    %1886 = vmatpush.bf16.msra.mxu0 %v1239
    %1887 = vmatpush.bf16.msra.mxu0 %v1235
    %1888 = vmatpush.bf16.msra.mxu0 %v1231
    %1889 = vmatpush.bf16.msra.mxu0 %v1227
    %1890 = vmatmul.bf16.gmra.mxu0 %v121
    %v1891 = vpop.f32.mrf.mxu0
    %v1892 = vadd.f32 %v1878, %v1891
    %v1893 = vpop.f32.mrf.mxu0
    %v1894 = vadd.f32 %v1880, %v1893
    %1895 = vdwg.mxu0
    %1896 = vmatpush.bf16.msra.mxu0 %v1287
    %1897 = vmatpush.bf16.msra.mxu0 %v1283
    %1898 = vmatpush.bf16.msra.mxu0 %v1279
    %1899 = vmatpush.bf16.msra.mxu0 %v1275
    %1900 = vmatpush.bf16.msra.mxu0 %v1271
    %1901 = vmatpush.bf16.msra.mxu0 %v1267
    %1902 = vmatpush.bf16.msra.mxu0 %v1263
    %1903 = vmatpush.bf16.msra.mxu0 %v1259
    %1904 = vmatmul.bf16.gmra.mxu0 %v122
    %v1905 = vpop.f32.mrf.mxu0
    %v1906 = vadd.f32 %v1892, %v1905
    %v1907 = vpop.f32.mrf.mxu0
    %v1908 = vadd.f32 %v1894, %v1907
    %1909 = vdwg.mxu0
    %1910 = vmatpush.bf16.msra.mxu0 0
    %1911 = vmatpush.bf16.msra.mxu0 0
    %1912 = vmatpush.bf16.msra.mxu0 %v1311
    %1913 = vmatpush.bf16.msra.mxu0 %v1307
    %1914 = vmatpush.bf16.msra.mxu0 %v1303
    %1915 = vmatpush.bf16.msra.mxu0 %v1299
    %1916 = vmatpush.bf16.msra.mxu0 %v1295
    %1917 = vmatpush.bf16.msra.mxu0 %v1291
    %1918 = vmatmul.bf16.gmra.mxu0 %v1530
    %v1919 = vpop.f32.mrf.mxu0
    %v1920 = vadd.f32 %v1906, %v1919
    %v1921 = vpop.f32.mrf.mxu0
    %v1922 = vadd.f32 %v1908, %v1921
    %1923 = vdwg.mxu0
    %v1924 = vsub.f32 %v186, %v1626
    %v1925 = vsub.f32 %v200, %v1724
    %v1926 = vsub.f32 %v214, %v1822
    %v1927 = vsub.f32 %v228, %v1920
    %v1928 = vsub.f32 %v188, %v1628
    %v1929 = vsub.f32 %v202, %v1726
    %v1930 = vsub.f32 %v216, %v1824
    %v1931 = vsub.f32 %v230, %v1922
    %v1932 = vld [vmem:[%s5] sm:$0xf]
    %v1934 = vperm.slane %v1932, 0
    %v1935 = vperm.slane %v1932, 1
    %v1936 = vperm.slane %v1932, 2
    %v1937 = vperm.slane %v1932, 3
    %v1942 = vadd.f32 %v1924, %v1934
    %v1943 = vadd.f32 %v1925, %v1935
    %v1944 = vadd.f32 %v1926, %v1936
    %v1945 = vadd.f32 %v1927, %v1937
    %v1946 = vadd.f32 %v1928, %v1934
    %v1947 = vadd.f32 %v1929, %v1935
    %v1948 = vadd.f32 %v1930, %v1936
    %v1949 = vadd.f32 %v1931, %v1937
    %v1950 = vmul.f32 %v1942, 0.01
    %v1951 = vmul.f32 %v1943, 0.01
    %v1952 = vmul.f32 %v1944, 0.01
    %v1953 = vmul.f32 %v1945, 0.01
    %v1954 = vmul.f32 %v1946, 0.01
    %v1955 = vmul.f32 %v1947, 0.01
    %v1956 = vmul.f32 %v1948, 0.01
    %v1957 = vmul.f32 %v1949, 0.01
    %v1958 = vmax.f32 %v1942, %v1950
    %v1959 = vmax.f32 %v1943, %v1951
    %v1960 = vmax.f32 %v1944, %v1952
    %v1961 = vmax.f32 %v1945, %v1953
    %v1962 = vmax.f32 %v1946, %v1954
    %v1963 = vmax.f32 %v1947, %v1955
    %v1964 = vmax.f32 %v1948, %v1956
    %v1965 = vmax.f32 %v1949, %v1957
    %v1966 = vpack.c.bf16 %v1962, %v1958
    %v1967 = vpack.c.bf16 %v1963, %v1959
    %v1968 = vpack.c.bf16 %v1964, %v1960
    %v1969 = vpack.c.bf16 %v1965, %v1961
    %v1970 = vld [vmem:[#allocation8] sm:$0xf]
    %v1971 = vld [vmem:[#allocation8 + $0x4] sm:$0xf]
    %v1972 = vld [vmem:[#allocation8 + $0x8] sm:$0xf]
    %v1973 = vld [vmem:[#allocation8 + $0xc] sm:$0xf]
    %v1974 = vld [vmem:[#allocation8 + $0x10] sm:$0xf]
    %v1975 = vld [vmem:[#allocation8 + $0x14] sm:$0xf]
    %v1976 = vld [vmem:[#allocation8 + $0x18] sm:$0xf]
    %v1977 = vld [vmem:[#allocation8 + $0x1c] sm:$0xf]
    %v1978 = vld [vmem:[#allocation8 + $0x20] sm:$0xf]
    %v1979 = vld [vmem:[#allocation8 + $0x24] sm:$0xf]
    %v1980 = vld [vmem:[#allocation8 + $0x28] sm:$0xf]
    %v1981 = vld [vmem:[#allocation8 + $0x2c] sm:$0xf]
    %v1982 = vld [vmem:[#allocation8 + $0x30] sm:$0xf]
    %v1983 = vld [vmem:[#allocation8 + $0x34] sm:$0xf]
    %v1984 = vld [vmem:[#allocation8 + $0x38] sm:$0xf]
    %v1985 = vld [vmem:[#allocation8 + $0x3c] sm:$0xf]
    %v1986 = vld [vmem:[#allocation8 + $0x40] sm:$0xf]
    %v1987 = vld [vmem:[#allocation8 + $0x44] sm:$0xf]
    %v1988 = vld [vmem:[#allocation8 + $0x48] sm:$0xf]
    %v1989 = vld [vmem:[#allocation8 + $0x4c] sm:$0xf]
    %v1990 = vld [vmem:[#allocation8 + $0x50] sm:$0xf]
    %v1991 = vld [vmem:[#allocation8 + $0x54] sm:$0xf]
    %v1992 = vld [vmem:[#allocation8 + $0x58] sm:$0xf]
    %v1993 = vld [vmem:[#allocation8 + $0x5c] sm:$0xf]
    %v1994 = vld [vmem:[#allocation8 + $0x60] sm:$0xf]
    %v1995 = vld [vmem:[#allocation8 + $0x64] sm:$0xf]
    %v1996 = vld [vmem:[#allocation8 + $0x68] sm:$0xf]
    %v1997 = vld [vmem:[#allocation8 + $0x6c] sm:$0xf]
    %v1998 = vld [vmem:[#allocation8 + $0x70] sm:$0xf]
    %v1999 = vld [vmem:[#allocation8 + $0x74] sm:$0xf]
    %v2000 = vld [vmem:[#allocation8 + $0x78] sm:$0xf]
    %v2001 = vld [vmem:[#allocation8 + $0x7c] sm:$0xf]
    %v2002 = vld [vmem:[#allocation8 + $0x80] sm:$0xf]
    %v2003 = vld [vmem:[#allocation8 + $0x84] sm:$0xf]
    %v2004 = vld [vmem:[#allocation8 + $0x88] sm:$0xf]
    %v2005 = vld [vmem:[#allocation8 + $0x8c] sm:$0xf]
    %v2006 = vld [vmem:[#allocation8 + $0x90] sm:$0xf]
    %v2007 = vld [vmem:[#allocation8 + $0x94] sm:$0xf]
    %v2008 = vld [vmem:[#allocation8 + $0x98] sm:$0xf]
    %v2009 = vld [vmem:[#allocation8 + $0x9c] sm:$0xf]
    %v2010 = vld [vmem:[#allocation8 + $0xa0] sm:$0xf]
    %v2011 = vld [vmem:[#allocation8 + $0xa4] sm:$0xf]
    %v2012 = vld [vmem:[#allocation8 + $0xa8] sm:$0xf]
    %v2013 = vld [vmem:[#allocation8 + $0xac] sm:$0xf]
    %v2014 = vld [vmem:[#allocation8 + $0xb0] sm:$0xf]
    %v2015 = vld [vmem:[#allocation8 + $0xb4] sm:$0xf]
    %v2016 = vld [vmem:[#allocation8 + $0xb8] sm:$0xf]
    %v2017 = vld [vmem:[#allocation8 + $0xbc] sm:$0xf]
    %v2018 = vld [vmem:[#allocation8 + $0xc0] sm:$0xf]
    %v2019 = vld [vmem:[#allocation8 + $0xc4] sm:$0xf]
    %v2020 = vld [vmem:[#allocation8 + $0xc8] sm:$0xf]
    %v2021 = vld [vmem:[#allocation8 + $0xcc] sm:$0xf]
    %v2022 = vld [vmem:[#allocation8 + $0xd0] sm:$0xf]
    %v2023 = vld [vmem:[#allocation8 + $0xd4] sm:$0xf]
    %v2024 = vld [vmem:[#allocation8 + $0xd8] sm:$0xf]
    %v2025 = vld [vmem:[#allocation8 + $0xdc] sm:$0xf]
    %v2026 = vld [vmem:[#allocation8 + $0xe0] sm:$0xf]
    %v2027 = vld [vmem:[#allocation8 + $0xe4] sm:$0xf]
    %v2028 = vld [vmem:[#allocation8 + $0xe8] sm:$0xf]
    %v2029 = vld [vmem:[#allocation8 + $0xec] sm:$0xf]
    %v2030 = vld [vmem:[#allocation8 + $0xf0] sm:$0xf]
    %v2031 = vld [vmem:[#allocation8 + $0xf4] sm:$0xf]
    %v2032 = vld [vmem:[#allocation8 + $0xf8] sm:$0xf]
    %v2033 = vld [vmem:[#allocation8 + $0xfc] sm:$0xf]
    %v2034 = vld [vmem:[%s7] sm:$0x1]
    %v2036 = vperm.slane %v2034, 0
    %v2102 = vunpack.c.l.b16 %v1970
    %v2103 = vunpack.c.l.b16 %v1971
    %v2104 = vunpack.c.l.b16 %v1972
    %v2105 = vunpack.c.l.b16 %v1973
    %v2106 = vunpack.c.l.b16 %v1974
    %v2107 = vunpack.c.l.b16 %v1975
    %v2108 = vunpack.c.l.b16 %v1976
    %v2109 = vunpack.c.l.b16 %v1977
    %v2110 = vunpack.c.l.b16 %v1978
    %v2111 = vunpack.c.l.b16 %v1979
    %v2112 = vunpack.c.l.b16 %v1980
    %v2113 = vunpack.c.l.b16 %v1981
    %v2114 = vunpack.c.l.b16 %v1982
    %v2115 = vunpack.c.l.b16 %v1983
    %v2116 = vunpack.c.l.b16 %v1984
    %v2117 = vunpack.c.l.b16 %v1985
    %v2118 = vunpack.c.l.b16 %v1986
    %v2119 = vunpack.c.l.b16 %v1987
    %v2120 = vunpack.c.l.b16 %v1988
    %v2121 = vunpack.c.l.b16 %v1989
    %v2122 = vunpack.c.l.b16 %v1990
    %v2123 = vunpack.c.l.b16 %v1991
    %v2124 = vunpack.c.l.b16 %v1992
    %v2125 = vunpack.c.l.b16 %v1993
    %v2126 = vunpack.c.l.b16 %v1994
    %v2127 = vunpack.c.l.b16 %v1995
    %v2128 = vunpack.c.l.b16 %v1996
    %v2129 = vunpack.c.l.b16 %v1997
    %v2130 = vunpack.c.l.b16 %v1998
    %v2131 = vunpack.c.l.b16 %v1999
    %v2132 = vunpack.c.l.b16 %v2000
    %v2133 = vunpack.c.l.b16 %v2001
    %v2134 = vunpack.c.l.b16 %v2002
    %v2135 = vunpack.c.l.b16 %v2003
    %v2136 = vunpack.c.l.b16 %v2004
    %v2137 = vunpack.c.l.b16 %v2005
    %v2138 = vunpack.c.l.b16 %v2006
    %v2139 = vunpack.c.l.b16 %v2007
    %v2140 = vunpack.c.l.b16 %v2008
    %v2141 = vunpack.c.l.b16 %v2009
    %v2142 = vunpack.c.l.b16 %v2010
    %v2143 = vunpack.c.l.b16 %v2011
    %v2144 = vunpack.c.l.b16 %v2012
    %v2145 = vunpack.c.l.b16 %v2013
    %v2146 = vunpack.c.l.b16 %v2014
    %v2147 = vunpack.c.l.b16 %v2015
    %v2148 = vunpack.c.l.b16 %v2016
    %v2149 = vunpack.c.l.b16 %v2017
    %v2150 = vunpack.c.l.b16 %v2018
    %v2151 = vunpack.c.l.b16 %v2019
    %v2152 = vunpack.c.l.b16 %v2020
    %v2153 = vunpack.c.l.b16 %v2021
    %v2154 = vunpack.c.l.b16 %v2022
    %v2155 = vunpack.c.l.b16 %v2023
    %v2156 = vunpack.c.l.b16 %v2024
    %v2157 = vunpack.c.l.b16 %v2025
    %v2158 = vunpack.c.l.b16 %v2026
    %v2159 = vunpack.c.l.b16 %v2027
    %v2160 = vunpack.c.l.b16 %v2028
    %v2161 = vunpack.c.l.b16 %v2029
    %v2162 = vunpack.c.l.b16 %v2030
    %v2163 = vunpack.c.l.b16 %v2031
    %v2164 = vunpack.c.l.b16 %v2032
    %v2165 = vunpack.c.l.b16 %v2033
    %v2166 = vpack.c.b16 %v2103, %v2102
    %v2167 = vpack.c.b16 %v2105, %v2104
    %v2168 = vpack.c.b16 %v2107, %v2106
    %v2169 = vpack.c.b16 %v2109, %v2108
    %v2170 = vpack.c.b16 %v2111, %v2110
    %v2171 = vpack.c.b16 %v2113, %v2112
    %v2172 = vpack.c.b16 %v2115, %v2114
    %v2173 = vpack.c.b16 %v2117, %v2116
    %v2174 = vpack.c.b16 %v2119, %v2118
    %v2175 = vpack.c.b16 %v2121, %v2120
    %v2176 = vpack.c.b16 %v2123, %v2122
    %v2177 = vpack.c.b16 %v2125, %v2124
    %v2178 = vpack.c.b16 %v2127, %v2126
    %v2179 = vpack.c.b16 %v2129, %v2128
    %v2180 = vpack.c.b16 %v2131, %v2130
    %v2181 = vpack.c.b16 %v2133, %v2132
    %v2182 = vpack.c.b16 %v2135, %v2134
    %v2183 = vpack.c.b16 %v2137, %v2136
    %v2184 = vpack.c.b16 %v2139, %v2138
    %v2185 = vpack.c.b16 %v2141, %v2140
    %v2186 = vpack.c.b16 %v2143, %v2142
    %v2187 = vpack.c.b16 %v2145, %v2144
    %v2188 = vpack.c.b16 %v2147, %v2146
    %v2189 = vpack.c.b16 %v2149, %v2148
    %v2190 = vpack.c.b16 %v2151, %v2150
    %v2191 = vpack.c.b16 %v2153, %v2152
    %v2192 = vpack.c.b16 %v2155, %v2154
    %v2193 = vpack.c.b16 %v2157, %v2156
    %v2194 = vpack.c.b16 %v2159, %v2158
    %v2195 = vpack.c.b16 %v2161, %v2160
    %v2196 = vpack.c.b16 %v2163, %v2162
    %v2197 = vpack.c.b16 %v2165, %v2164
    %2230 = vmatpush.bf16.msra.mxu0 %v2173
    %2231 = vmatpush.bf16.msra.mxu0 %v2172
    %2232 = vmatpush.bf16.msra.mxu0 %v2171
    %2233 = vmatpush.bf16.msra.mxu0 %v2170
    %2234 = vmatpush.bf16.msra.mxu0 %v2169
    %2235 = vmatpush.bf16.msra.mxu0 %v2168
    %2236 = vmatpush.bf16.msra.mxu0 %v2167
    %2237 = vmatpush.bf16.msra.mxu0 %v2166
    %2238 = vmatmul.bf16.gmra.mxu0 %v1966
    %v2239 = vpop.f32.mrf.mxu0
    %v2240 = vadd.f32 %v2036, %v2239
    %v2241 = vpop.f32.mrf.mxu0
    %v2242 = vadd.f32 %v2036, %v2241
    %2243 = vdwg.mxu0
    %2244 = vmatpush.bf16.msra.mxu0 %v2181
    %2245 = vmatpush.bf16.msra.mxu0 %v2180
    %2246 = vmatpush.bf16.msra.mxu0 %v2179
    %2247 = vmatpush.bf16.msra.mxu0 %v2178
    %2248 = vmatpush.bf16.msra.mxu0 %v2177
    %2249 = vmatpush.bf16.msra.mxu0 %v2176
    %2250 = vmatpush.bf16.msra.mxu0 %v2175
    %2251 = vmatpush.bf16.msra.mxu0 %v2174
    %2252 = vmatmul.bf16.gmra.mxu0 %v1967
    %v2253 = vpop.f32.mrf.mxu0
    %v2254 = vadd.f32 %v2240, %v2253
    %v2255 = vpop.f32.mrf.mxu0
    %v2256 = vadd.f32 %v2242, %v2255
    %2257 = vdwg.mxu0
    %2258 = vmatpush.bf16.msra.mxu0 %v2189
    %2259 = vmatpush.bf16.msra.mxu0 %v2188
    %2260 = vmatpush.bf16.msra.mxu0 %v2187
    %2261 = vmatpush.bf16.msra.mxu0 %v2186
    %2262 = vmatpush.bf16.msra.mxu0 %v2185
    %2263 = vmatpush.bf16.msra.mxu0 %v2184
    %2264 = vmatpush.bf16.msra.mxu0 %v2183
    %2265 = vmatpush.bf16.msra.mxu0 %v2182
    %2266 = vmatmul.bf16.gmra.mxu0 %v1968
    %v2267 = vpop.f32.mrf.mxu0
    %v2268 = vadd.f32 %v2254, %v2267
    %v2269 = vpop.f32.mrf.mxu0
    %v2270 = vadd.f32 %v2256, %v2269
    %2271 = vdwg.mxu0
    %2272 = vmatpush.bf16.msra.mxu0 %v2197
    %2273 = vmatpush.bf16.msra.mxu0 %v2196
    %2274 = vmatpush.bf16.msra.mxu0 %v2195
    %2275 = vmatpush.bf16.msra.mxu0 %v2194
    %2276 = vmatpush.bf16.msra.mxu0 %v2193
    %2277 = vmatpush.bf16.msra.mxu0 %v2192
    %2278 = vmatpush.bf16.msra.mxu0 %v2191
    %2279 = vmatpush.bf16.msra.mxu0 %v2190
    %2280 = vmatmul.bf16.gmra.mxu0 %v1969
    %v2281 = vpop.f32.mrf.mxu0
    %v2282 = vadd.f32 %v2268, %v2281
    %v2283 = vpop.f32.mrf.mxu0
    %v2284 = vadd.f32 %v2270, %v2283
    %2285 = vdwg.mxu0
    %v2286 = vmul.f32 %v2282, 0.01
    %v2287 = vmul.f32 %v2284, 0.01
    %v2288 = vmax.f32 %v2282, %v2286
    %v2289 = vmax.f32 %v2284, %v2287
    %v2290 = vpack.c.bf16 %v2289, %v2288
    %v2291 = vld [vmem:[%s8] sm:$0xf]
    %v2292 = vld [vmem:[%s8 + $0x4] sm:$0xf]
    %v2293 = vld [vmem:[%s8 + $0x8] sm:$0xf]
    %v2294 = vld [vmem:[%s8 + $0xc] sm:$0xf]
    %v2295 = vld [vmem:[%s8 + $0x10] sm:$0xf]
    %v2296 = vld [vmem:[%s8 + $0x14] sm:$0xf]
    %v2297 = vld [vmem:[%s8 + $0x18] sm:$0xf]
    %v2298 = vld [vmem:[%s8 + $0x1c] sm:$0xf]
    %v2299 = vld [vmem:[%s8 + $0x20] sm:$0xf]
    %v2300 = vld [vmem:[%s8 + $0x24] sm:$0xf]
    %v2301 = vld [vmem:[%s8 + $0x28] sm:$0xf]
    %v2302 = vld [vmem:[%s8 + $0x2c] sm:$0xf]
    %v2303 = vld [vmem:[%s8 + $0x30] sm:$0xf]
    %v2304 = vld [vmem:[%s8 + $0x34] sm:$0xf]
    %v2305 = vld [vmem:[%s8 + $0x38] sm:$0xf]
    %v2306 = vld [vmem:[%s8 + $0x3c] sm:$0xf]
    %v2307 = vld [vmem:[%s9] sm:$0x1]
    %v2309 = vperm.slane %v2307, 0
    %v2327 = vunpack.c.l.b16 %v2291
    %v2328 = vunpack.c.l.b16 %v2292
    %v2329 = vunpack.c.l.b16 %v2293
    %v2330 = vunpack.c.l.b16 %v2294
    %v2331 = vunpack.c.l.b16 %v2295
    %v2332 = vunpack.c.l.b16 %v2296
    %v2333 = vunpack.c.l.b16 %v2297
    %v2334 = vunpack.c.l.b16 %v2298
    %v2335 = vunpack.c.l.b16 %v2299
    %v2336 = vunpack.c.l.b16 %v2300
    %v2337 = vunpack.c.l.b16 %v2301
    %v2338 = vunpack.c.l.b16 %v2302
    %v2339 = vunpack.c.l.b16 %v2303
    %v2340 = vunpack.c.l.b16 %v2304
    %v2341 = vunpack.c.l.b16 %v2305
    %v2342 = vunpack.c.l.b16 %v2306
    %v2343 = vpack.c.b16 %v2328, %v2327
    %v2344 = vpack.c.b16 %v2330, %v2329
    %v2345 = vpack.c.b16 %v2332, %v2331
    %v2346 = vpack.c.b16 %v2334, %v2333
    %v2347 = vpack.c.b16 %v2336, %v2335
    %v2348 = vpack.c.b16 %v2338, %v2337
    %v2349 = vpack.c.b16 %v2340, %v2339
    %v2350 = vpack.c.b16 %v2342, %v2341
    %2359 = vmatpush.bf16.msra.mxu0 %v2350
    %2360 = vmatpush.bf16.msra.mxu0 %v2349
    %2361 = vmatpush.bf16.msra.mxu0 %v2348
    %2362 = vmatpush.bf16.msra.mxu0 %v2347
    %2363 = vmatpush.bf16.msra.mxu0 %v2346
    %2364 = vmatpush.bf16.msra.mxu0 %v2345
    %2365 = vmatpush.bf16.msra.mxu0 %v2344
    %2366 = vmatpush.bf16.msra.mxu0 %v2343
    %2367 = vmatmul.bf16.gmra.mxu0 %v2290
    %v2368 = vpop.f32.mrf.mxu0
    %v2369 = vadd.f32 %v2309, %v2368
    %v2370 = vpop.f32.mrf.mxu0
    %v2371 = vadd.f32 %v2309, %v2370
    %2372 = vdwg.mxu0
    %v2373 = vtanh.pop %v2369
    %v2374 = vtanh.pop %v2371
    %v2375 = vld [vmem:[#allocation5] sm:$0xf]
    %v2376 = vld [vmem:[#allocation5 + $0x4] sm:$0xf]
    %v2377 = vld [vmem:[#allocation5 + $0x8] sm:$0xf]
    %v2378 = vld [vmem:[#allocation5 + $0xc] sm:$0xf]
    %v2379 = vld [vmem:[#allocation5 + $0x10] sm:$0xf]
    %v2380 = vld [vmem:[#allocation5 + $0x14] sm:$0xf]
    %v2381 = vunpack.c.l.bf16 %v2375
    %v2382 = vunpack.c.l.bf16 %v2376
    %v2383 = vunpack.c.l.bf16 %v2377
    %v2384 = vunpack.c.l.bf16 %v2378
    %v2385 = vunpack.c.l.bf16 %v2379
    %v2386 = vunpack.c.l.bf16 %v2380
    %v2387 = vmul.f32 %v2381, %v2373
    %v2388 = vmul.f32 %v2382, %v2374
    %v2389 = vmul.f32 %v2383, %v2373
    %v2390 = vmul.f32 %v2384, %v2374
    %v2391 = vmul.f32 %v2385, %v2373
    %v2392 = vmul.f32 %v2386, %v2374
    %vm2393 = vcmask 220160
    %v2394 = vsel %vm2393, %v2387, 0.0
    %2395 = vadd.xlane.f32.xlu0 %v2394
    %v2396 = vpop.xlane.xlu0 %2395
    %v2397 = vsel %vm2393, %v2388, 0.0
    %2398 = vadd.xlane.f32.xlu0 %v2397
    %v2399 = vpop.xlane.xlu0 %2398
    %v2400 = vsel %vm2393, %v2389, 0.0
    %2401 = vadd.xlane.f32.xlu0 %v2400
    %v2402 = vpop.xlane.xlu0 %2401
    %v2403 = vsel %vm2393, %v2390, 0.0
    %2404 = vadd.xlane.f32.xlu0 %v2403
    %v2405 = vpop.xlane.xlu0 %2404
    %v2406 = vsel %vm2393, %v2391, 0.0
    %2407 = vadd.xlane.f32.xlu0 %v2406
    %v2408 = vpop.xlane.xlu0 %2407
    %v2409 = vsel %vm2393, %v2392, 0.0
    %2410 = vadd.xlane.f32.xlu0 %v2409
    %v2411 = vpop.xlane.xlu0 %2410
    %v2418 = vlaneseq
    %v2419 = vand.u32 %v2418, 127
    %v2420 = vperm.slane %v2396, %v2419
    %v2421 = vadd.s32 %v2419, 4294967288
    %v2422 = vperm.slane %v2399, %v2421
    %vm2423 = vcmask 130112
    %v2424 = vsel %vm2423, %v2422, %v2420
    %v2425 = vperm.slane %v2402, %v2419
    %v2426 = vperm.slane %v2405, %v2421
    %v2427 = vsel %vm2423, %v2426, %v2425
    %v2428 = vperm.slane %v2408, %v2419
    %v2429 = vperm.slane %v2411, %v2421
    %v2430 = vsel %vm2423, %v2429, %v2428
    %vm2431 = vcmask 1041409
    %v2432 = vsel %vm2431, %v2427, %v2424
    %vm2433 = vcmask 1042434
    %v2434 = vsel %vm2433, %v2430, %v2432
    %vm2436 = vcmask 124928
    %2437 = vst.msk [vmem:[#allocation10] sm:$0x7] %vm2436, %v2434
    // Predicated region
    $region58: #{tpu_custom_call.1} parent=1 // pred_check
      _
    $region59: #{tpu_custom_call.1} parent=1 // pred_check_branch
      %2439 = sbr.rel (0) target = $region61
    $region60: #{tpu_custom_call.1} parent=1 // pred_region
      %2441 = vsyncadd [#allocation4], 0
      %s2443 = sshll.u32 [#allocation10], 4
      %s2444 = int_to_ptr.vmem [resolvable:$true] %s2443
      %s2445 = sshll.u32 %s10, 4
      %s2446 = int_to_ptr.hbm [resolvable:$true] %s2445
      %2448 = dma.vmem_to_hbm [thread:$0]  %s2444, 64, %s2446, [#allocation4]
    $region61: #{tpu_custom_call.1} parent=1 // pred_fallthru
      _
    // Predicated region
    $region62: #{tpu_custom_call.1} parent=1 // pred_check
      _
    $region63: #{tpu_custom_call.1} parent=1 // pred_check_branch
      %2450 = sbr.rel (0) target = $region65
    $region64: #{tpu_custom_call.1} parent=1 // pred_region
      %2452 = dma.done [#allocation4], 64
    $region65: #{tpu_custom_call.1} parent=1 // pred_fallthru
      _
    %2453 = vsyncpa [#allocation3], 1
    %2454 = vsyncpa [#allocation6], 1
    %2455 = vsyncpa [#allocation9], 1
    %2456 = vsyncpa [#allocation4], 1

</llo_original>
